<compile_context>
chip_gen: v7x
topology: tpu7x:2x2x1
jax: 0.10.0
libtpu: 0.0.40
codegen_flags: <defaults>
</compile_context>

<pallas_src>
import functools

import jax
import jax.numpy as jnp
import numpy as np
from jax.experimental import pallas as pl
from jax.experimental.pallas import tpu as pltpu


# -----------------------------------------------------------------------------
# Kernel: fused n-layer 3x3 "same" conv cascade with PReLU between layers.
# -----------------------------------------------------------------------------
def _cascade_kernel(*refs, n_convs, H, W, chans, bt):
    """refs layout:
      refs[0]              : x_ref     (bt, H, W*C0)            input block (lane-dense)
      refs[1 : 1+2n]       : w0,b0,... banded weights (3, W*Cin_l, W*Cout_l) / biases (1, W*Cout_l)
      refs[1+2n]           : alpha_ref (1,) in SMEM             shared PReLU slope
      refs[2+2n]           : o_ref     (bt, H, W*Cn)            output block (lane-dense)
      refs[3+2n : 3+3n]    : pad_refs  (bt, H+2, W*C_l) VMEM    H-padded per-layer inputs
    """
    x_ref = refs[0]
    layer_refs = refs[1:1 + 2 * n_convs]
    alpha_ref = refs[1 + 2 * n_convs]
    o_ref = refs[2 + 2 * n_convs]
    pad_refs = refs[3 + 2 * n_convs:]

    alpha = alpha_ref[0]

    # Zero only the two halo rows of every padded buffer.  Done every grid step
    # (not just program_id==0) so correctness does not depend on which TensorCore
    # ran step 0 when the "parallel" grid axis is sharded (megacore / v7x).
    for p in pad_refs:
        zrow = jnp.zeros((bt, 1, p.shape[-1]), p.dtype)
        p[:, 0:1, :] = zrow
        p[:, H + 1:H + 2, :] = zrow

    # Stage the input block into the interior rows of the first padded buffer
    # (full-lane, offset-0 store: unmasked).
    for b in range(bt):
        pad_refs[0][b, 1:H + 1, :] = x_ref[b].astype(pad_refs[0].dtype)

    cur = pad_refs[0]
    for l in range(n_convs):
        w_ref = layer_refs[2 * l]        # (3, W*Cin_l, W*Cout_l) banded weight
        b_ref = layer_refs[2 * l + 1]    # (1, W*Cout_l)          W-tiled bias
        last = l == n_convs - 1
        for b in range(bt):
            # 3 banded matmuls (one per kernel row dy).  W-padding lives in the
            # band, so each LHS is just a sublane-shifted full-lane row slice —
            # no reshape / relayout, f32 accumulation on the MXU.
            acc = jnp.dot(cur[b, 0:H, :], w_ref[0],
                          preferred_element_type=jnp.float32)
            acc = acc + jnp.dot(cur[b, 1:H + 1, :], w_ref[1],
                                preferred_element_type=jnp.float32)
            acc = acc + jnp.dot(cur[b, 2:H + 2, :], w_ref[2],
                                preferred_element_type=jnp.float32)
            acc = acc + b_ref[0, :]
            if last:
                o_ref[b] = acc.astype(o_ref.dtype)          # lane-dense store
            else:
                act = jnp.where(acc >= 0.0, acc, alpha * acc)  # PReLU
                pad_refs[l + 1][b, 1:H + 1, :] = act.astype(pad_refs[l + 1].dtype)
        if not last:
            cur = pad_refs[l + 1]


# -----------------------------------------------------------------------------
# Wrapper-side one-time weight re-layout: torch (Cout, Cin, 3, 3) -> banded
# (3, W*Cin, W*Cout) matrices whose band implements the 3-tap dx window with
# "same" zero padding clipped at the image edges.
# -----------------------------------------------------------------------------
def _banded_weight(w_oihw, W):
    Cout, Cin, KH, KW = w_oihw.shape
    assert KH == 3 and KW == 3, "kernel specialized to 3x3 convs (padding=1)"
    wt = jnp.transpose(w_oihw, (2, 3, 1, 0))          # (3, 3, Cin, Cout)
    bands = []
    for dy in range(3):
        acc = jnp.zeros((W * Cin, W * Cout), wt.dtype)
        for dx in range(3):
            # S[w', w] = 1 iff w' == w + dx - 1  (shifted identity; clipped at edges)
            shift = jnp.eye(W, k=1 - dx, dtype=wt.dtype)
            acc = acc + jnp.kron(shift, wt[dy, dx])
        bands.append(acc)
    return jnp.stack(bands)                            # (3, W*Cin, W*Cout)


def conv2d_cascade(x, weights, biases, alpha, *, images_per_step=1):
    """Forward pass of the Conv2d cascade.  x: (N, C_in, H, W) -> (N, C_out, H, W)."""
    N, C0, H, W = x.shape
    n_convs = len(weights)
    chans = (C0,) + tuple(int(w.shape[0]) for w in weights)
    Cn = chans[-1]
    bt = images_per_step
    assert N % bt == 0, "batch must be divisible by images_per_step"

    # NCHW -> lane-dense (N, H, W*C0): layout plumbing done once in XLA.
    x_flat = jnp.transpose(x, (0, 2, 3, 1)).reshape(N, H, W * C0)

    # One-time lane-friendly weight / bias re-layout.
    banded = [_banded_weight(w, W) for w in weights]
    tiled_bias = [jnp.tile(b, W).reshape(1, W * b.shape[0]) for b in biases]
    alpha_arr = jnp.asarray(alpha, jnp.float32).reshape(1)

    in_specs = [pl.BlockSpec((bt, H, W * C0), lambda i: (i, 0, 0))]
    operands = [x_flat]
    for l in range(n_convs):
        kl, nl = W * chans[l], W * chans[l + 1]
        in_specs.append(pl.BlockSpec((3, kl, nl), lambda i: (0, 0, 0)))
        operands.append(banded[l])
        in_specs.append(pl.BlockSpec((1, nl), lambda i: (0, 0)))
        operands.append(tiled_bias[l])
    in_specs.append(pl.BlockSpec(memory_space=pltpu.MemorySpace.SMEM))  # PReLU slope
    operands.append(alpha_arr)

    kernel = functools.partial(_cascade_kernel, n_convs=n_convs, H=H, W=W,
                               chans=chans, bt=bt)

    out_flat = pl.pallas_call(
        kernel,
        out_shape=jax.ShapeDtypeStruct((N, H, W * Cn), x.dtype),
        grid_spec=pltpu.PrefetchScalarGridSpec(
            num_scalar_prefetch=0,
            grid=(N // bt,),
            in_specs=in_specs,
            out_specs=pl.BlockSpec((bt, H, W * Cn), lambda i: (i, 0, 0)),
            scratch_shapes=[
                pltpu.VMEM((bt, H + 2, W * chans[l]), jnp.float32)
                for l in range(n_convs)
            ],
        ),
        compiler_params=pltpu.CompilerParams(
            dimension_semantics=("parallel",),
            vmem_limit_bytes=32 * 1024 * 1024,
        ),
    )(*operands)

    # (N, H, W*Cn) -> (N, Cn, H, W)
    return out_flat.reshape(N, H, W, Cn).transpose(0, 3, 1, 2)


# -----------------------------------------------------------------------------
# Demo / correctness check.
# -----------------------------------------------------------------------------
if __name__ == "__main__":
    # Small module-consistent shapes: batch=2, in_channels=4, hidden_channels=8,
    # out_channels=8, spatial 16x16, n_convs=3.  (W*channels hits 64/128 lanes.)
    N, CIN, CHID, COUT, H, W = 2, 4, 8, 8, 16, 16
    N_CONVS = 3

    key = jax.random.PRNGKey(0)
    keys = jax.random.split(key, 1 + 2 * N_CONVS)
    x = jax.random.normal(keys[0], (N, CIN, H, W), dtype=jnp.float32)

    cins = [CIN] + [CHID] * (N_CONVS - 1)
    couts = [CHID] * (N_CONVS - 1) + [COUT]
    weights, biases = [], []
    for l in range(N_CONVS):
        bound = 1.0 / np.sqrt(cins[l] * 9)
        weights.append(jax.random.uniform(
            keys[1 + 2 * l], (couts[l], cins[l], 3, 3), jnp.float32,
            minval=-bound, maxval=bound))
        biases.append(jax.random.uniform(
            keys[2 + 2 * l], (couts[l],), jnp.float32,
            minval=-bound, maxval=bound))
    alpha = 0.25  # nn.PReLU() default init (single shared parameter)

    fwd = jax.jit(functools.partial(conv2d_cascade, images_per_step=1))
    out = jax.block_until_ready(fwd(x, weights, biases, alpha))
    assert out.shape == (N, COUT, H, W), out.shape

    # Also exercise the multi-image-per-grid-step path.
    fwd2 = jax.jit(functools.partial(conv2d_cascade, images_per_step=2))
    out2 = jax.block_until_ready(fwd2(x, weights, biases, alpha))

    # Pure-XLA reference (NHWC convs + PReLU), matching the PyTorch module.
    def ref_forward(x_nchw):
        y = jnp.transpose(x_nchw, (0, 2, 3, 1))
        for l in range(N_CONVS):
            w_hwio = jnp.transpose(weights[l], (2, 3, 1, 0))
            y = jax.lax.conv_general_dilated(
                y, w_hwio, window_strides=(1, 1), padding="SAME",
                dimension_numbers=("NHWC", "HWIO", "NHWC"),
                precision=jax.lax.Precision.HIGHEST) + biases[l]
            if l != N_CONVS - 1:
                y = jnp.where(y >= 0, y, alpha * y)
        return jnp.transpose(y, (0, 3, 1, 2))

    ref = jax.block_until_ready(jax.jit(ref_forward)(x))

    np.testing.assert_allclose(np.asarray(out), np.asarray(ref), atol=5e-4, rtol=5e-4)
    np.testing.assert_allclose(np.asarray(out2), np.asarray(ref), atol=5e-4, rtol=5e-4)

    print("KERNEL_OK")
</pallas_src>

<mosaic_0001>
module attributes {stable_mosaic.version = 11 : i64} {
  func.func @_cascade_kernel(%arg0: i32, %arg1: memref<1x16x64xf32, #tpu.memory_space<vmem>>, %arg2: memref<3x64x128xf32, #tpu.memory_space<vmem>>, %arg3: memref<1x128xf32, #tpu.memory_space<vmem>>, %arg4: memref<3x128x128xf32, #tpu.memory_space<vmem>>, %arg5: memref<1x128xf32, #tpu.memory_space<vmem>>, %arg6: memref<3x128x128xf32, #tpu.memory_space<vmem>>, %arg7: memref<1x128xf32, #tpu.memory_space<vmem>>, %arg8: memref<1xf32, #tpu.memory_space<smem>>, %arg9: memref<1x16x128xf32, #tpu.memory_space<vmem>>, %arg10: memref<1x18x64xf32, #tpu.memory_space<vmem>>, %arg11: memref<1x18x128xf32, #tpu.memory_space<vmem>>, %arg12: memref<1x18x128xf32, #tpu.memory_space<vmem>>) attributes {dimension_semantics = [#tpu.dimension_semantics<parallel>], iteration_bounds = array<i64: 2>, scalar_prefetch = 0 : i64, scratch_operands = 3 : i64, tpu.core_type = #tpu.core_type<tc>, window_params = [{transform_indices = @transform_0, window_bounds = array<i64: 1, 16, 64>}, {pipeline_mode = #tpu.pipeline_mode<synchronous>, transform_indices = @transform_1, window_bounds = array<i64: 3, 64, 128>}, {pipeline_mode = #tpu.pipeline_mode<synchronous>, transform_indices = @transform_2, window_bounds = array<i64: 1, 128>}, {pipeline_mode = #tpu.pipeline_mode<synchronous>, transform_indices = @transform_3, window_bounds = array<i64: 3, 128, 128>}, {pipeline_mode = #tpu.pipeline_mode<synchronous>, transform_indices = @transform_4, window_bounds = array<i64: 1, 128>}, {pipeline_mode = #tpu.pipeline_mode<synchronous>, transform_indices = @transform_5, window_bounds = array<i64: 3, 128, 128>}, {pipeline_mode = #tpu.pipeline_mode<synchronous>, transform_indices = @transform_6, window_bounds = array<i64: 1, 128>}, {transform_indices = @transform_7, window_bounds = array<i64: 1>}, {transform_indices = @transform_8, window_bounds = array<i64: 1, 16, 128>}]} {
    %c0 = arith.constant 0 : index
    %0 = memref.load %arg8[%c0] : memref<1xf32, #tpu.memory_space<smem>>
    %cst = arith.constant 0.000000e+00 : f32
    %1 = vector.broadcast %cst : f32 to vector<1x1x64xf32>
    %c0_0 = arith.constant 0 : index
    %c0_1 = arith.constant 0 : index
    %c0_2 = arith.constant 0 : index
    %2 = vector.load %arg10[%c0_0, %c0_1, %c0_2] : memref<1x18x64xf32, #tpu.memory_space<vmem>>, vector<1x1x64xf32>
    tpu.vector_store %arg10[%c0_0, %c0_1, %c0_2], %1 {strides = array<i32>} : memref<1x18x64xf32, #tpu.memory_space<vmem>>, vector<1x1x64xf32>,
    %c0_3 = arith.constant 0 : index
    %c17 = arith.constant 17 : index
    %c0_4 = arith.constant 0 : index
    %3 = vector.load %arg10[%c0_3, %c17, %c0_4] : memref<1x18x64xf32, #tpu.memory_space<vmem>>, vector<1x1x64xf32>
    tpu.vector_store %arg10[%c0_3, %c17, %c0_4], %1 {strides = array<i32>} : memref<1x18x64xf32, #tpu.memory_space<vmem>>, vector<1x1x64xf32>,
    %cst_5 = arith.constant 0.000000e+00 : f32
    %4 = vector.broadcast %cst_5 : f32 to vector<1x1x128xf32>
    %c0_6 = arith.constant 0 : index
    %c0_7 = arith.constant 0 : index
    %c0_8 = arith.constant 0 : index
    %5 = vector.load %arg11[%c0_6, %c0_7, %c0_8] : memref<1x18x128xf32, #tpu.memory_space<vmem>>, vector<1x1x128xf32>
    tpu.vector_store %arg11[%c0_6, %c0_7, %c0_8], %4 {strides = array<i32>} : memref<1x18x128xf32, #tpu.memory_space<vmem>>, vector<1x1x128xf32>,
    %c0_9 = arith.constant 0 : index
    %c17_10 = arith.constant 17 : index
    %c0_11 = arith.constant 0 : index
    %6 = vector.load %arg11[%c0_9, %c17_10, %c0_11] : memref<1x18x128xf32, #tpu.memory_space<vmem>>, vector<1x1x128xf32>
    tpu.vector_store %arg11[%c0_9, %c17_10, %c0_11], %4 {strides = array<i32>} : memref<1x18x128xf32, #tpu.memory_space<vmem>>, vector<1x1x128xf32>,
    %cst_12 = arith.constant 0.000000e+00 : f32
    %7 = vector.broadcast %cst_12 : f32 to vector<1x1x128xf32>
    %c0_13 = arith.constant 0 : index
    %c0_14 = arith.constant 0 : index
    %c0_15 = arith.constant 0 : index
    %8 = vector.load %arg12[%c0_13, %c0_14, %c0_15] : memref<1x18x128xf32, #tpu.memory_space<vmem>>, vector<1x1x128xf32>
    tpu.vector_store %arg12[%c0_13, %c0_14, %c0_15], %7 {strides = array<i32>} : memref<1x18x128xf32, #tpu.memory_space<vmem>>, vector<1x1x128xf32>,
    %c0_16 = arith.constant 0 : index
    %c17_17 = arith.constant 17 : index
    %c0_18 = arith.constant 0 : index
    %9 = vector.load %arg12[%c0_16, %c17_17, %c0_18] : memref<1x18x128xf32, #tpu.memory_space<vmem>>, vector<1x1x128xf32>
    tpu.vector_store %arg12[%c0_16, %c17_17, %c0_18], %7 {strides = array<i32>} : memref<1x18x128xf32, #tpu.memory_space<vmem>>, vector<1x1x128xf32>,
    %c0_19 = arith.constant 0 : index
    %c0_20 = arith.constant 0 : index
    %c0_21 = arith.constant 0 : index
    %10 = vector.load %arg1[%c0_19, %c0_20, %c0_21] : memref<1x16x64xf32, #tpu.memory_space<vmem>>, vector<1x16x64xf32>
    %11 = vector.shape_cast %10 : vector<1x16x64xf32> to vector<16x64xf32>
    %c0_22 = arith.constant 0 : index
    %c1 = arith.constant 1 : index
    %c0_23 = arith.constant 0 : index
    %12 = vector.load %arg10[%c0_22, %c1, %c0_23] : memref<1x18x64xf32, #tpu.memory_space<vmem>>, vector<1x16x64xf32>
    %13 = vector.shape_cast %12 : vector<1x16x64xf32> to vector<16x64xf32>
    %14 = vector.shape_cast %11 : vector<16x64xf32> to vector<1x16x64xf32>
    tpu.vector_store %arg10[%c0_22, %c1, %c0_23], %14 {strides = array<i32>} : memref<1x18x64xf32, #tpu.memory_space<vmem>>, vector<1x16x64xf32>,
    %c0_24 = arith.constant 0 : index
    %c0_25 = arith.constant 0 : index
    %c0_26 = arith.constant 0 : index
    %15 = vector.load %arg10[%c0_24, %c0_25, %c0_26] : memref<1x18x64xf32, #tpu.memory_space<vmem>>, vector<1x16x64xf32>
    %16 = vector.shape_cast %15 : vector<1x16x64xf32> to vector<16x64xf32>
    %c0_27 = arith.constant 0 : index
    %c0_28 = arith.constant 0 : index
    %c0_29 = arith.constant 0 : index
    %17 = vector.load %arg2[%c0_27, %c0_28, %c0_29] : memref<3x64x128xf32, #tpu.memory_space<vmem>>, vector<1x64x128xf32>
    %18 = vector.shape_cast %17 : vector<1x64x128xf32> to vector<64x128xf32>
    %cst_30 = arith.constant dense<0.000000e+00> : vector<16x128xf32>
    %19 = tpu.matmul %16, %18, %cst_30 {dimension_numbers = #tpu.dot_dimension_numbers<[1], [0], [0], [1], [0, 0, 1, 1], [], []>} : vector<16x64xf32>, vector<64x128xf32>, vector<16x128xf32> -> vector<16x128xf32>
    %c0_31 = arith.constant 0 : index
    %c1_32 = arith.constant 1 : index
    %c0_33 = arith.constant 0 : index
    %20 = vector.load %arg10[%c0_31, %c1_32, %c0_33] : memref<1x18x64xf32, #tpu.memory_space<vmem>>, vector<1x16x64xf32>
    %21 = vector.shape_cast %20 : vector<1x16x64xf32> to vector<16x64xf32>
    %c1_34 = arith.constant 1 : index
    %c0_35 = arith.constant 0 : index
    %c0_36 = arith.constant 0 : index
    %22 = vector.load %arg2[%c1_34, %c0_35, %c0_36] : memref<3x64x128xf32, #tpu.memory_space<vmem>>, vector<1x64x128xf32>
    %23 = vector.shape_cast %22 : vector<1x64x128xf32> to vector<64x128xf32>
    %cst_37 = arith.constant dense<0.000000e+00> : vector<16x128xf32>
    %24 = tpu.matmul %21, %23, %cst_37 {dimension_numbers = #tpu.dot_dimension_numbers<[1], [0], [0], [1], [0, 0, 1, 1], [], []>} : vector<16x64xf32>, vector<64x128xf32>, vector<16x128xf32> -> vector<16x128xf32>
    %25 = arith.addf %19, %24 : vector<16x128xf32>
    %c0_38 = arith.constant 0 : index
    %c2 = arith.constant 2 : index
    %c0_39 = arith.constant 0 : index
    %26 = vector.load %arg10[%c0_38, %c2, %c0_39] : memref<1x18x64xf32, #tpu.memory_space<vmem>>, vector<1x16x64xf32>
    %27 = vector.shape_cast %26 : vector<1x16x64xf32> to vector<16x64xf32>
    %c2_40 = arith.constant 2 : index
    %c0_41 = arith.constant 0 : index
    %c0_42 = arith.constant 0 : index
    %28 = vector.load %arg2[%c2_40, %c0_41, %c0_42] : memref<3x64x128xf32, #tpu.memory_space<vmem>>, vector<1x64x128xf32>
    %29 = vector.shape_cast %28 : vector<1x64x128xf32> to vector<64x128xf32>
    %cst_43 = arith.constant dense<0.000000e+00> : vector<16x128xf32>
    %30 = tpu.matmul %27, %29, %cst_43 {dimension_numbers = #tpu.dot_dimension_numbers<[1], [0], [0], [1], [0, 0, 1, 1], [], []>} : vector<16x64xf32>, vector<64x128xf32>, vector<16x128xf32> -> vector<16x128xf32>
    %31 = arith.addf %25, %30 : vector<16x128xf32>
    %c0_44 = arith.constant 0 : index
    %c0_45 = arith.constant 0 : index
    %32 = vector.load %arg3[%c0_44, %c0_45] : memref<1x128xf32, #tpu.memory_space<vmem>>, vector<1x128xf32>
    %33 = vector.shape_cast %32 : vector<1x128xf32> to vector<128xf32>
    %34 = vector.shape_cast %33 : vector<128xf32> to vector<1x128xf32>
    %35 = vector.broadcast %34 : vector<1x128xf32> to vector<16x128xf32>
    %36 = arith.addf %31, %35 : vector<16x128xf32>
    %cst_46 = arith.constant 0.000000e+00 : f32
    %37 = vector.broadcast %cst_46 : f32 to vector<16x128xf32>
    %38 = arith.cmpf oge, %36, %37 : vector<16x128xf32>
    %39 = vector.broadcast %0 : f32 to vector<16x128xf32>
    %40 = arith.mulf %39, %36 : vector<16x128xf32>
    %41 = arith.select %38, %36, %40 : vector<16x128xi1>, vector<16x128xf32>
    %c0_47 = arith.constant 0 : index
    %c1_48 = arith.constant 1 : index
    %c0_49 = arith.constant 0 : index
    %42 = vector.load %arg11[%c0_47, %c1_48, %c0_49] : memref<1x18x128xf32, #tpu.memory_space<vmem>>, vector<1x16x128xf32>
    %43 = vector.shape_cast %42 : vector<1x16x128xf32> to vector<16x128xf32>
    %44 = vector.shape_cast %41 : vector<16x128xf32> to vector<1x16x128xf32>
    tpu.vector_store %arg11[%c0_47, %c1_48, %c0_49], %44 {strides = array<i32>} : memref<1x18x128xf32, #tpu.memory_space<vmem>>, vector<1x16x128xf32>,
    %c0_50 = arith.constant 0 : index
    %c0_51 = arith.constant 0 : index
    %c0_52 = arith.constant 0 : index
    %45 = vector.load %arg11[%c0_50, %c0_51, %c0_52] : memref<1x18x128xf32, #tpu.memory_space<vmem>>, vector<1x16x128xf32>
    %46 = vector.shape_cast %45 : vector<1x16x128xf32> to vector<16x128xf32>
    %c0_53 = arith.constant 0 : index
    %c0_54 = arith.constant 0 : index
    %c0_55 = arith.constant 0 : index
    %47 = vector.load %arg4[%c0_53, %c0_54, %c0_55] : memref<3x128x128xf32, #tpu.memory_space<vmem>>, vector<1x128x128xf32>
    %48 = vector.shape_cast %47 : vector<1x128x128xf32> to vector<128x128xf32>
    %cst_56 = arith.constant dense<0.000000e+00> : vector<16x128xf32>
    %49 = tpu.matmul %46, %48, %cst_56 {dimension_numbers = #tpu.dot_dimension_numbers<[1], [0], [0], [1], [0, 0, 1, 1], [], []>} : vector<16x128xf32>, vector<128x128xf32>, vector<16x128xf32> -> vector<16x128xf32>
    %c0_57 = arith.constant 0 : index
    %c1_58 = arith.constant 1 : index
    %c0_59 = arith.constant 0 : index
    %50 = vector.load %arg11[%c0_57, %c1_58, %c0_59] : memref<1x18x128xf32, #tpu.memory_space<vmem>>, vector<1x16x128xf32>
    %51 = vector.shape_cast %50 : vector<1x16x128xf32> to vector<16x128xf32>
    %c1_60 = arith.constant 1 : index
    %c0_61 = arith.constant 0 : index
    %c0_62 = arith.constant 0 : index
    %52 = vector.load %arg4[%c1_60, %c0_61, %c0_62] : memref<3x128x128xf32, #tpu.memory_space<vmem>>, vector<1x128x128xf32>
    %53 = vector.shape_cast %52 : vector<1x128x128xf32> to vector<128x128xf32>
    %cst_63 = arith.constant dense<0.000000e+00> : vector<16x128xf32>
    %54 = tpu.matmul %51, %53, %cst_63 {dimension_numbers = #tpu.dot_dimension_numbers<[1], [0], [0], [1], [0, 0, 1, 1], [], []>} : vector<16x128xf32>, vector<128x128xf32>, vector<16x128xf32> -> vector<16x128xf32>
    %55 = arith.addf %49, %54 : vector<16x128xf32>
    %c0_64 = arith.constant 0 : index
    %c2_65 = arith.constant 2 : index
    %c0_66 = arith.constant 0 : index
    %56 = vector.load %arg11[%c0_64, %c2_65, %c0_66] : memref<1x18x128xf32, #tpu.memory_space<vmem>>, vector<1x16x128xf32>
    %57 = vector.shape_cast %56 : vector<1x16x128xf32> to vector<16x128xf32>
    %c2_67 = arith.constant 2 : index
    %c0_68 = arith.constant 0 : index
    %c0_69 = arith.constant 0 : index
    %58 = vector.load %arg4[%c2_67, %c0_68, %c0_69] : memref<3x128x128xf32, #tpu.memory_space<vmem>>, vector<1x128x128xf32>
    %59 = vector.shape_cast %58 : vector<1x128x128xf32> to vector<128x128xf32>
    %cst_70 = arith.constant dense<0.000000e+00> : vector<16x128xf32>
    %60 = tpu.matmul %57, %59, %cst_70 {dimension_numbers = #tpu.dot_dimension_numbers<[1], [0], [0], [1], [0, 0, 1, 1], [], []>} : vector<16x128xf32>, vector<128x128xf32>, vector<16x128xf32> -> vector<16x128xf32>
    %61 = arith.addf %55, %60 : vector<16x128xf32>
    %c0_71 = arith.constant 0 : index
    %c0_72 = arith.constant 0 : index
    %62 = vector.load %arg5[%c0_71, %c0_72] : memref<1x128xf32, #tpu.memory_space<vmem>>, vector<1x128xf32>
    %63 = vector.shape_cast %62 : vector<1x128xf32> to vector<128xf32>
    %64 = vector.shape_cast %63 : vector<128xf32> to vector<1x128xf32>
    %65 = vector.broadcast %64 : vector<1x128xf32> to vector<16x128xf32>
    %66 = arith.addf %61, %65 : vector<16x128xf32>
    %cst_73 = arith.constant 0.000000e+00 : f32
    %67 = vector.broadcast %cst_73 : f32 to vector<16x128xf32>
    %68 = arith.cmpf oge, %66, %67 : vector<16x128xf32>
    %69 = vector.broadcast %0 : f32 to vector<16x128xf32>
    %70 = arith.mulf %69, %66 : vector<16x128xf32>
    %71 = arith.select %68, %66, %70 : vector<16x128xi1>, vector<16x128xf32>
    %c0_74 = arith.constant 0 : index
    %c1_75 = arith.constant 1 : index
    %c0_76 = arith.constant 0 : index
    %72 = vector.load %arg12[%c0_74, %c1_75, %c0_76] : memref<1x18x128xf32, #tpu.memory_space<vmem>>, vector<1x16x128xf32>
    %73 = vector.shape_cast %72 : vector<1x16x128xf32> to vector<16x128xf32>
    %74 = vector.shape_cast %71 : vector<16x128xf32> to vector<1x16x128xf32>
    tpu.vector_store %arg12[%c0_74, %c1_75, %c0_76], %74 {strides = array<i32>} : memref<1x18x128xf32, #tpu.memory_space<vmem>>, vector<1x16x128xf32>,
    %c0_77 = arith.constant 0 : index
    %c0_78 = arith.constant 0 : index
    %c0_79 = arith.constant 0 : index
    %75 = vector.load %arg12[%c0_77, %c0_78, %c0_79] : memref<1x18x128xf32, #tpu.memory_space<vmem>>, vector<1x16x128xf32>
    %76 = vector.shape_cast %75 : vector<1x16x128xf32> to vector<16x128xf32>
    %c0_80 = arith.constant 0 : index
    %c0_81 = arith.constant 0 : index
    %c0_82 = arith.constant 0 : index
    %77 = vector.load %arg6[%c0_80, %c0_81, %c0_82] : memref<3x128x128xf32, #tpu.memory_space<vmem>>, vector<1x128x128xf32>
    %78 = vector.shape_cast %77 : vector<1x128x128xf32> to vector<128x128xf32>
    %cst_83 = arith.constant dense<0.000000e+00> : vector<16x128xf32>
    %79 = tpu.matmul %76, %78, %cst_83 {dimension_numbers = #tpu.dot_dimension_numbers<[1], [0], [0], [1], [0, 0, 1, 1], [], []>} : vector<16x128xf32>, vector<128x128xf32>, vector<16x128xf32> -> vector<16x128xf32>
    %c0_84 = arith.constant 0 : index
    %c1_85 = arith.constant 1 : index
    %c0_86 = arith.constant 0 : index
    %80 = vector.load %arg12[%c0_84, %c1_85, %c0_86] : memref<1x18x128xf32, #tpu.memory_space<vmem>>, vector<1x16x128xf32>
    %81 = vector.shape_cast %80 : vector<1x16x128xf32> to vector<16x128xf32>
    %c1_87 = arith.constant 1 : index
    %c0_88 = arith.constant 0 : index
    %c0_89 = arith.constant 0 : index
    %82 = vector.load %arg6[%c1_87, %c0_88, %c0_89] : memref<3x128x128xf32, #tpu.memory_space<vmem>>, vector<1x128x128xf32>
    %83 = vector.shape_cast %82 : vector<1x128x128xf32> to vector<128x128xf32>
    %cst_90 = arith.constant dense<0.000000e+00> : vector<16x128xf32>
    %84 = tpu.matmul %81, %83, %cst_90 {dimension_numbers = #tpu.dot_dimension_numbers<[1], [0], [0], [1], [0, 0, 1, 1], [], []>} : vector<16x128xf32>, vector<128x128xf32>, vector<16x128xf32> -> vector<16x128xf32>
    %85 = arith.addf %79, %84 : vector<16x128xf32>
    %c0_91 = arith.constant 0 : index
    %c2_92 = arith.constant 2 : index
    %c0_93 = arith.constant 0 : index
    %86 = vector.load %arg12[%c0_91, %c2_92, %c0_93] : memref<1x18x128xf32, #tpu.memory_space<vmem>>, vector<1x16x128xf32>
    %87 = vector.shape_cast %86 : vector<1x16x128xf32> to vector<16x128xf32>
    %c2_94 = arith.constant 2 : index
    %c0_95 = arith.constant 0 : index
    %c0_96 = arith.constant 0 : index
    %88 = vector.load %arg6[%c2_94, %c0_95, %c0_96] : memref<3x128x128xf32, #tpu.memory_space<vmem>>, vector<1x128x128xf32>
    %89 = vector.shape_cast %88 : vector<1x128x128xf32> to vector<128x128xf32>
    %cst_97 = arith.constant dense<0.000000e+00> : vector<16x128xf32>
    %90 = tpu.matmul %87, %89, %cst_97 {dimension_numbers = #tpu.dot_dimension_numbers<[1], [0], [0], [1], [0, 0, 1, 1], [], []>} : vector<16x128xf32>, vector<128x128xf32>, vector<16x128xf32> -> vector<16x128xf32>
    %91 = arith.addf %85, %90 : vector<16x128xf32>
    %c0_98 = arith.constant 0 : index
    %c0_99 = arith.constant 0 : index
    %92 = vector.load %arg7[%c0_98, %c0_99] : memref<1x128xf32, #tpu.memory_space<vmem>>, vector<1x128xf32>
    %93 = vector.shape_cast %92 : vector<1x128xf32> to vector<128xf32>
    %94 = vector.shape_cast %93 : vector<128xf32> to vector<1x128xf32>
    %95 = vector.broadcast %94 : vector<1x128xf32> to vector<16x128xf32>
    %96 = arith.addf %91, %95 : vector<16x128xf32>
    %c0_100 = arith.constant 0 : index
    %c0_101 = arith.constant 0 : index
    %c0_102 = arith.constant 0 : index
    %97 = vector.load %arg9[%c0_100, %c0_101, %c0_102] : memref<1x16x128xf32, #tpu.memory_space<vmem>>, vector<1x16x128xf32>
    %98 = vector.shape_cast %97 : vector<1x16x128xf32> to vector<16x128xf32>
    %99 = vector.shape_cast %96 : vector<16x128xf32> to vector<1x16x128xf32>
    tpu.vector_store %arg9[%c0_100, %c0_101, %c0_102], %99 {strides = array<i32>} : memref<1x16x128xf32, #tpu.memory_space<vmem>>, vector<1x16x128xf32>,
    return
  }
  func.func @transform_0(%arg0: i32) -> (i32, i32, i32) {
    %c0_i32 = arith.constant 0 : i32
    %c0_i32_0 = arith.constant 0 : i32
    %c0_i32_1 = arith.constant 0 : i32
    return %arg0, %c0_i32, %c0_i32_0 : i32, i32, i32
  }
  func.func @transform_1(%arg0: i32) -> (i32, i32, i32) {
    %c0_i32 = arith.constant 0 : i32
    %c0_i32_0 = arith.constant 0 : i32
    %c0_i32_1 = arith.constant 0 : i32
    %c0_i32_2 = arith.constant 0 : i32
    return %c0_i32, %c0_i32_0, %c0_i32_1 : i32, i32, i32
  }
  func.func @transform_2(%arg0: i32) -> (i32, i32) {
    %c0_i32 = arith.constant 0 : i32
    %c0_i32_0 = arith.constant 0 : i32
    %c0_i32_1 = arith.constant 0 : i32
    return %c0_i32, %c0_i32_0 : i32, i32
  }
  func.func @transform_3(%arg0: i32) -> (i32, i32, i32) {
    %c0_i32 = arith.constant 0 : i32
    %c0_i32_0 = arith.constant 0 : i32
    %c0_i32_1 = arith.constant 0 : i32
    %c0_i32_2 = arith.constant 0 : i32
    return %c0_i32, %c0_i32_0, %c0_i32_1 : i32, i32, i32
  }
  func.func @transform_4(%arg0: i32) -> (i32, i32) {
    %c0_i32 = arith.constant 0 : i32
    %c0_i32_0 = arith.constant 0 : i32
    %c0_i32_1 = arith.constant 0 : i32
    return %c0_i32, %c0_i32_0 : i32, i32
  }
  func.func @transform_5(%arg0: i32) -> (i32, i32, i32) {
    %c0_i32 = arith.constant 0 : i32
    %c0_i32_0 = arith.constant 0 : i32
    %c0_i32_1 = arith.constant 0 : i32
    %c0_i32_2 = arith.constant 0 : i32
    return %c0_i32, %c0_i32_0, %c0_i32_1 : i32, i32, i32
  }
  func.func @transform_6(%arg0: i32) -> (i32, i32) {
    %c0_i32 = arith.constant 0 : i32
    %c0_i32_0 = arith.constant 0 : i32
    %c0_i32_1 = arith.constant 0 : i32
    return %c0_i32, %c0_i32_0 : i32, i32
  }
  func.func @transform_7(%arg0: i32) -> i32 {
    %c0_i32 = arith.constant 0 : i32
    %c0_i32_0 = arith.constant 0 : i32
    return %c0_i32 : i32
  }
  func.func @transform_8(%arg0: i32) -> (i32, i32, i32) {
    %c0_i32 = arith.constant 0 : i32
    %c0_i32_0 = arith.constant 0 : i32
    %c0_i32_1 = arith.constant 0 : i32
    return %arg0, %c0_i32, %c0_i32_0 : i32, i32, i32
  }
}

</mosaic_0001>

<llo_original>
// kernel: tile.18
$region0: #{tile.18}
  #allocation0 [shape = 's32[1]{0}', space=sflag, size = 0x4, scoped, tag = 'scoped memory for tile.18']
  %s0 = inlined_call_operand.vmem [shape: f32[8], index: 0, kind: input, shape index: {}]
  %s1 = inlined_call_operand.vmem [shape: f32[16,8], index: 1, kind: output, shape index: {}]
  // Predicated region
  $region2: #{tile.18} parent=0 // pred_check
    _
  $region3: #{tile.18} parent=0 // pred_check_branch
    %3 = sbr.rel (0) target = $region5
  $region4: #{tile.18} parent=0 // pred_region
    _
  $region5: #{tile.18} parent=0 // pred_fallthru
    _
  %v4 = vld [vmem:[%s0] ss:$0 sm:$0xff]
  %5 = vst [vmem:[%s1] sm:$0xff] %v4
  %s6 = scalar_lea.vmem %s1, 8
  %7 = vst [vmem:[%s6] sm:$0xff] %v4

// kernel: tile.19
$region0: #{tile.19}
  %s0 = inlined_call_operand.vmem [shape: f32[16,8], index: 0, kind: input, shape index: {}]
  %s1 = inlined_call_operand.vmem [shape: f32[1,128], index: 1, kind: output, shape index: {}]
  $region1: #{tile.19} parent=0
    #allocation0 [shape = 'u8[4096]{0}', space=vmem, size = 0x1000, scoped, tag = 'scoped mem for output reshape']
    %v2 = vld [vmem:[%s0] sm:$0x1]
    %vm3 = vcmask 64512
    %4 = vst.msk [vmem:[#allocation0] sm:$0x1] %vm3, %v2
    %s5 = scalar_lea.vmem %s0, 15
    %v6 = vld [vmem:[%s5] sm:$0x1]
    %7 = vrot.lane.b32.xlu0 %v6, 120
    %v8 = vpop.permute.xlu0 %7
    %vm9 = vcmask 1048512
    %10 = vst.msk [vmem:[#allocation0] sm:$0x1] %vm9, %v8
    %s11 = scalar_lea.vmem %s0, 14
    %v12 = vld [vmem:[%s11] sm:$0x1]
    %13 = vrot.lane.b32.xlu0 %v12, 112
    %v14 = vpop.permute.xlu0 %13
    %vm15 = vcmask 982912
    %16 = vst.msk [vmem:[#allocation0] sm:$0x1] %vm15, %v14
    %s17 = scalar_lea.vmem %s0, 13
    %v18 = vld [vmem:[%s17] sm:$0x1]
    %19 = vrot.lane.b32.xlu0 %v18, 104
    %v20 = vpop.permute.xlu0 %19
    %vm21 = vcmask 917312
    %22 = vst.msk [vmem:[#allocation0] sm:$0x1] %vm21, %v20
    %s23 = scalar_lea.vmem %s0, 12
    %v24 = vld [vmem:[%s23] sm:$0x1]
    %25 = vrot.lane.b32.xlu0 %v24, 96
    %v26 = vpop.permute.xlu0 %25
    %vm27 = vcmask 851712
    %28 = vst.msk [vmem:[#allocation0] sm:$0x1] %vm27, %v26
    %s29 = scalar_lea.vmem %s0, 11
    %v30 = vld [vmem:[%s29] sm:$0x1]
    %31 = vrot.lane.b32.xlu0 %v30, 88
    %v32 = vpop.permute.xlu0 %31
    %vm33 = vcmask 786112
    %34 = vst.msk [vmem:[#allocation0] sm:$0x1] %vm33, %v32
    %s35 = scalar_lea.vmem %s0, 10
    %v36 = vld [vmem:[%s35] sm:$0x1]
    %37 = vrot.lane.b32.xlu0 %v36, 80
    %v38 = vpop.permute.xlu0 %37
    %vm39 = vcmask 720512
    %40 = vst.msk [vmem:[#allocation0] sm:$0x1] %vm39, %v38
    %s41 = scalar_lea.vmem %s0, 9
    %v42 = vld [vmem:[%s41] sm:$0x1]
    %43 = vrot.lane.b32.xlu0 %v42, 72
    %v44 = vpop.permute.xlu0 %43
    %vm45 = vcmask 654912
    %46 = vst.msk [vmem:[#allocation0] sm:$0x1] %vm45, %v44
    %s47 = scalar_lea.vmem %s0, 8
    %v48 = vld [vmem:[%s47] sm:$0x1]
    %49 = vrot.lane.b32.xlu0 %v48, 64
    %v50 = vpop.permute.xlu0 %49
    %vm51 = vcmask 589312
    %52 = vst.msk [vmem:[#allocation0] sm:$0x1] %vm51, %v50
    %s53 = scalar_lea.vmem %s0, 7
    %v54 = vld [vmem:[%s53] sm:$0x1]
    %55 = vrot.lane.b32.xlu0 %v54, 56
    %v56 = vpop.permute.xlu0 %55
    %vm57 = vcmask 523712
    %58 = vst.msk [vmem:[#allocation0] sm:$0x1] %vm57, %v56
    %s59 = scalar_lea.vmem %s0, 6
    %v60 = vld [vmem:[%s59] sm:$0x1]
    %61 = vrot.lane.b32.xlu0 %v60, 48
    %v62 = vpop.permute.xlu0 %61
    %vm63 = vcmask 458112
    %64 = vst.msk [vmem:[#allocation0] sm:$0x1] %vm63, %v62
    %s65 = scalar_lea.vmem %s0, 5
    %v66 = vld [vmem:[%s65] sm:$0x1]
    %67 = vrot.lane.b32.xlu0 %v66, 40
    %v68 = vpop.permute.xlu0 %67
    %vm69 = vcmask 392512
    %70 = vst.msk [vmem:[#allocation0] sm:$0x1] %vm69, %v68
    %s71 = scalar_lea.vmem %s0, 4
    %v72 = vld [vmem:[%s71] sm:$0x1]
    %73 = vrot.lane.b32.xlu0 %v72, 32
    %v74 = vpop.permute.xlu0 %73
    %vm75 = vcmask 326912
    %76 = vst.msk [vmem:[#allocation0] sm:$0x1] %vm75, %v74
    %s77 = scalar_lea.vmem %s0, 3
    %v78 = vld [vmem:[%s77] sm:$0x1]
    %79 = vrot.lane.b32.xlu0 %v78, 24
    %v80 = vpop.permute.xlu0 %79
    %vm81 = vcmask 261312
    %82 = vst.msk [vmem:[#allocation0] sm:$0x1] %vm81, %v80
    %s83 = scalar_lea.vmem %s0, 2
    %v84 = vld [vmem:[%s83] sm:$0x1]
    %85 = vrot.lane.b32.xlu0 %v84, 16
    %v86 = vpop.permute.xlu0 %85
    %vm87 = vcmask 195712
    %88 = vst.msk [vmem:[#allocation0] sm:$0x1] %vm87, %v86
    %s89 = scalar_lea.vmem %s0, 1
    %v90 = vld [vmem:[%s89] sm:$0x1]
    %91 = vrot.lane.b32.xlu0 %v90, 8
    %v92 = vpop.permute.xlu0 %91
    %vm93 = vcmask 130112
    %94 = vst.msk [vmem:[#allocation0] sm:$0x1] %vm93, %v92
    %s96 = sshllo.u32 0, 1
    %v98 = vld [vmem:[#allocation0] sm:%s96]
    %s99 = sshllo.u32 0, 1
    %100 = vst [vmem:[%s1] sm:%s99] %v98

// kernel: conv2d_cascade.1
$region0: #{conv2d_cascade.1}
  #allocation0 [shape = 'u32[]', space=smem, size = 0x4, offset = 0x4, fixed_abs, tag = 'smem constant byte address 0x4 - core index']
  #allocation1 [shape = 'u32[144,128]{1,0:T(1,128)}', space=vmem, size = 0x12000, scoped, tag = 'internal scratch']
  #allocation2 [shape = 'f32[1,18,64]{2,1,0:T(8,128)}', space=vmem, size = 0x3000, scoped, tag = 'scratch operand']
  #allocation3 [shape = 'f32[1,18,128]{2,1,0:T(8,128)}', space=vmem, size = 0x3000, scoped, tag = 'scratch operand']
  #allocation4 [shape = 'f32[1,18,128]{2,1,0:T(8,128)}', space=vmem, size = 0x3000, scoped, tag = 'scratch operand']
  #allocation5 [shape = 'f32[1]{0:T(128)S(6)}', space=smem, size = 0x200, scoped, tag = 'scoped memory for conv2d_cascade.1']
  %s0 = inlined_call_operand.vmem [shape: f32[2,16,64], index: 0, kind: input, shape index: {}]
  %s1 = inlined_call_operand.vmem [shape: f32[3,64,128], index: 1, kind: input, shape index: {}]
  %s2 = inlined_call_operand.vmem [shape: f32[1,128], index: 2, kind: input, shape index: {}]
  %s3 = inlined_call_operand.vmem [shape: f32[3,128,128], index: 3, kind: input, shape index: {}]
  %s4 = inlined_call_operand.vmem [shape: f32[1,128], index: 4, kind: input, shape index: {}]
  %s5 = inlined_call_operand.vmem [shape: f32[3,128,128], index: 5, kind: input, shape index: {}]
  %s6 = inlined_call_operand.vmem [shape: f32[1,128], index: 6, kind: input, shape index: {}]
  %s7 = inlined_call_operand.<no memory space> [shape: f32[1], index: 7, kind: input, shape index: {}]
  %s8 = inlined_call_operand.vmem [shape: f32[2,16,128], index: 8, kind: output, shape index: {}]
  %s9 = sld [smem:[#allocation0]]
  $region65: #{conv2d_cascade.1} parent=0
    _
  %s11 = ssub.s32 1, %s9
  %s12 = scalar_select 0, %s11, %s9
  %13 = sst [smem:[#allocation5]] %s7
  loop: start=0, step=1, limit=4
  $region2: #{conv2d_cascade.1} parent=0 // loop_pre_header
    _
  $region3: #{conv2d_cascade.1} parent=0 // loop_header
    %s15 = sphi 0, %s19
    %p16 = scmp.ge.s32.totalorder %s15, 4
    %s25 = sphi 0, %s27
    %s28 = sphi 0, %s25
    %s29 = sphi 0, %s28
    %s45 = sphi 0, %s29
    %s49 = sphi 0, %s49
    %s51 = sphi 0, %s49
    %s52 = sphi 0, %s51
    %s66 = sphi 0, %s52
    %s70 = sphi 0, %s70
    %s72 = sphi 0, %s70
    %s73 = sphi 0, %s72
    %s87 = sphi 0, %s73
    %s91 = sphi 0, %s91
    %s93 = sphi 0, %s91
    %s94 = sphi 0, %s93
    %s108 = sphi 0, %s94
    %s112 = sphi 0, %s112
    %s114 = sphi 0, %s112
    %s115 = sphi 0, %s114
    %s129 = sphi 0, %s115
    %s133 = sphi 0, %s133
    %s135 = sphi 0, %s133
    %s136 = sphi 0, %s135
    %s150 = sphi 0, %s136
    %s154 = sphi 0, %s154
    %s156 = sphi 0, %s154
    %s157 = sphi 0, %s156
    %s171 = sphi 0, %s157
    %s175 = sphi 0, %s175
    %s177 = sphi 0, %s175
    %s178 = sphi 0, %s177
    %s192 = sphi 0, %s178
    %s198 = sphi 0, %s200
    %s201 = sphi 0, %s198
    %s202 = sphi 0, %s201
    %s218 = sphi 0, %s202
  $region4: #{conv2d_cascade.1} parent=0 // loop_header_branch
    %18 = sbr.rel (%p16) target = $region8
  $region5: #{conv2d_cascade.1} parent=0 // loop_body
    %s20 = ssub.s32 %s15, 1
    %s21 = ssub.s32 %s15, 2
    %s22 = sadd.s32 %s15, 1
    %s23 = ssub.s32 %s15, %s22
    %p24 = scmp.eq.s32.totalorder %s23, 0
    %s26 = sadd.s32 %s25, 1
    %s27 = scalar_select %p24, %s25, %s26
    %p30 = pneg %p24
    %p31 = scmp.eq.s32.totalorder %s15, 1
    %p32 = por %p30, %p31
    %p33 = scmp.ne.s32.totalorder %s25, %s28
    %p34 = scmp.eq.s32.totalorder %s15, 0
    %p35 = por %p33, %p34
    %p36 = scmp.ne.s32.totalorder %s25, %s28
    %p37 = scmp.eq.s32.totalorder %s20, 1
    %p38 = por %p36, %p37
    %p39 = scmp.ne.s32.totalorder %s28, %s29
    %p40 = scmp.eq.s32.totalorder %s20, 0
    %p41 = por %p39, %p40
    %p42 = scmp.ne.s32.totalorder %s28, %s29
    %p43 = scmp.eq.s32.totalorder %s21, 1
    %p44 = por %p42, %p43
    %p46 = scmp.ne.s32.totalorder %s29, %s45
    %p47 = scmp.eq.s32.totalorder %s21, 0
    %p48 = por %p46, %p47
    %s50 = sadd.s32 %s49, 1
    %p53 = scmp.eq.s32.totalorder %s15, 1
    %p54 = scmp.ne.s32.totalorder %s49, %s51
    %p55 = scmp.eq.s32.totalorder %s15, 0
    %p56 = por %p54, %p55
    %p57 = scmp.ne.s32.totalorder %s49, %s51
    %p58 = scmp.eq.s32.totalorder %s20, 1
    %p59 = por %p57, %p58
    %p60 = scmp.ne.s32.totalorder %s51, %s52
    %p61 = scmp.eq.s32.totalorder %s20, 0
    %p62 = por %p60, %p61
    %p63 = scmp.ne.s32.totalorder %s51, %s52
    %p64 = scmp.eq.s32.totalorder %s21, 1
    %p65 = por %p63, %p64
    %p67 = scmp.ne.s32.totalorder %s52, %s66
    %p68 = scmp.eq.s32.totalorder %s21, 0
    %p69 = por %p67, %p68
    %s71 = sadd.s32 %s70, 1
    %p74 = scmp.eq.s32.totalorder %s15, 1
    %p75 = scmp.ne.s32.totalorder %s70, %s72
    %p76 = scmp.eq.s32.totalorder %s15, 0
    %p77 = por %p75, %p76
    %p78 = scmp.ne.s32.totalorder %s70, %s72
    %p79 = scmp.eq.s32.totalorder %s20, 1
    %p80 = por %p78, %p79
    %p81 = scmp.ne.s32.totalorder %s72, %s73
    %p82 = scmp.eq.s32.totalorder %s20, 0
    %p83 = por %p81, %p82
    %p84 = scmp.ne.s32.totalorder %s72, %s73
    %p85 = scmp.eq.s32.totalorder %s21, 1
    %p86 = por %p84, %p85
    %p88 = scmp.ne.s32.totalorder %s73, %s87
    %p89 = scmp.eq.s32.totalorder %s21, 0
    %p90 = por %p88, %p89
    %s92 = sadd.s32 %s91, 1
    %p95 = scmp.eq.s32.totalorder %s15, 1
    %p96 = scmp.ne.s32.totalorder %s91, %s93
    %p97 = scmp.eq.s32.totalorder %s15, 0
    %p98 = por %p96, %p97
    %p99 = scmp.ne.s32.totalorder %s91, %s93
    %p100 = scmp.eq.s32.totalorder %s20, 1
    %p101 = por %p99, %p100
    %p102 = scmp.ne.s32.totalorder %s93, %s94
    %p103 = scmp.eq.s32.totalorder %s20, 0
    %p104 = por %p102, %p103
    %p105 = scmp.ne.s32.totalorder %s93, %s94
    %p106 = scmp.eq.s32.totalorder %s21, 1
    %p107 = por %p105, %p106
    %p109 = scmp.ne.s32.totalorder %s94, %s108
    %p110 = scmp.eq.s32.totalorder %s21, 0
    %p111 = por %p109, %p110
    %s113 = sadd.s32 %s112, 1
    %p116 = scmp.eq.s32.totalorder %s15, 1
    %p117 = scmp.ne.s32.totalorder %s112, %s114
    %p118 = scmp.eq.s32.totalorder %s15, 0
    %p119 = por %p117, %p118
    %p120 = scmp.ne.s32.totalorder %s112, %s114
    %p121 = scmp.eq.s32.totalorder %s20, 1
    %p122 = por %p120, %p121
    %p123 = scmp.ne.s32.totalorder %s114, %s115
    %p124 = scmp.eq.s32.totalorder %s20, 0
    %p125 = por %p123, %p124
    %p126 = scmp.ne.s32.totalorder %s114, %s115
    %p127 = scmp.eq.s32.totalorder %s21, 1
    %p128 = por %p126, %p127
    %p130 = scmp.ne.s32.totalorder %s115, %s129
    %p131 = scmp.eq.s32.totalorder %s21, 0
    %p132 = por %p130, %p131
    %s134 = sadd.s32 %s133, 1
    %p137 = scmp.eq.s32.totalorder %s15, 1
    %p138 = scmp.ne.s32.totalorder %s133, %s135
    %p139 = scmp.eq.s32.totalorder %s15, 0
    %p140 = por %p138, %p139
    %p141 = scmp.ne.s32.totalorder %s133, %s135
    %p142 = scmp.eq.s32.totalorder %s20, 1
    %p143 = por %p141, %p142
    %p144 = scmp.ne.s32.totalorder %s135, %s136
    %p145 = scmp.eq.s32.totalorder %s20, 0
    %p146 = por %p144, %p145
    %p147 = scmp.ne.s32.totalorder %s135, %s136
    %p148 = scmp.eq.s32.totalorder %s21, 1
    %p149 = por %p147, %p148
    %p151 = scmp.ne.s32.totalorder %s136, %s150
    %p152 = scmp.eq.s32.totalorder %s21, 0
    %p153 = por %p151, %p152
    %s155 = sadd.s32 %s154, 1
    %p158 = scmp.eq.s32.totalorder %s15, 1
    %p159 = scmp.ne.s32.totalorder %s154, %s156
    %p160 = scmp.eq.s32.totalorder %s15, 0
    %p161 = por %p159, %p160
    %p162 = scmp.ne.s32.totalorder %s154, %s156
    %p163 = scmp.eq.s32.totalorder %s20, 1
    %p164 = por %p162, %p163
    %p165 = scmp.ne.s32.totalorder %s156, %s157
    %p166 = scmp.eq.s32.totalorder %s20, 0
    %p167 = por %p165, %p166
    %p168 = scmp.ne.s32.totalorder %s156, %s157
    %p169 = scmp.eq.s32.totalorder %s21, 1
    %p170 = por %p168, %p169
    %p172 = scmp.ne.s32.totalorder %s157, %s171
    %p173 = scmp.eq.s32.totalorder %s21, 0
    %p174 = por %p172, %p173
    %s176 = sadd.s32 %s175, 1
    %p179 = scmp.eq.s32.totalorder %s15, 1
    %p180 = scmp.ne.s32.totalorder %s175, %s177
    %p181 = scmp.eq.s32.totalorder %s15, 0
    %p182 = por %p180, %p181
    %p183 = scmp.ne.s32.totalorder %s175, %s177
    %p184 = scmp.eq.s32.totalorder %s20, 1
    %p185 = por %p183, %p184
    %p186 = scmp.ne.s32.totalorder %s177, %s178
    %p187 = scmp.eq.s32.totalorder %s20, 0
    %p188 = por %p186, %p187
    %p189 = scmp.ne.s32.totalorder %s177, %s178
    %p190 = scmp.eq.s32.totalorder %s21, 1
    %p191 = por %p189, %p190
    %p193 = scmp.ne.s32.totalorder %s178, %s192
    %p194 = scmp.eq.s32.totalorder %s21, 0
    %p195 = por %p193, %p194
    %s196 = ssub.s32 %s15, %s22
    %p197 = scmp.eq.s32.totalorder %s196, 0
    %s199 = sadd.s32 %s198, 1
    %s200 = scalar_select %p197, %s198, %s199
    %p203 = pneg %p197
    %p204 = scmp.eq.s32.totalorder %s15, 1
    %p205 = por %p203, %p204
    %p206 = scmp.ne.s32.totalorder %s198, %s201
    %p207 = scmp.eq.s32.totalorder %s15, 0
    %p208 = por %p206, %p207
    %p209 = scmp.ne.s32.totalorder %s198, %s201
    %p210 = scmp.eq.s32.totalorder %s20, 1
    %p211 = por %p209, %p210
    %p212 = scmp.ne.s32.totalorder %s201, %s202
    %p213 = scmp.eq.s32.totalorder %s20, 0
    %p214 = por %p212, %p213
    %p215 = scmp.ne.s32.totalorder %s201, %s202
    %p216 = scmp.eq.s32.totalorder %s21, 1
    %p217 = por %p215, %p216
    %p219 = scmp.ne.s32.totalorder %s202, %s218
    %p220 = scmp.eq.s32.totalorder %s21, 0
    %p221 = por %p219, %p220
    %p222 = scmp.le.s32.totalorder 1, %s15
    %p223 = scmp.lt.s32.totalorder %s15, 3
    %p224 = pnand %p222, %p223
    %p225 = pneg %p224
    // Predicated region
    $region9: #{conv2d_cascade.1} parent=5 // pred_check
      _
    $region10: #{conv2d_cascade.1} parent=5 // pred_check_branch
      %227 = sbr.rel (%p224) target = $region12
    $region11: #{conv2d_cascade.1} parent=5 // pred_region
      %s228 = ssub.s32 %s15, 1
      // Predicated region
      $region13: #{conv2d_cascade.1} parent=11 // pred_check
        %p229 = pneg %p62
      $region14: #{conv2d_cascade.1} parent=11 // pred_check_branch
        %231 = sbr.rel (%p229) target = $region16
      $region15: #{conv2d_cascade.1} parent=11 // pred_region
        _
      $region16: #{conv2d_cascade.1} parent=11 // pred_fallthru
        _
      // Predicated region
      $region17: #{conv2d_cascade.1} parent=11 // pred_check
        %p232 = pneg %p83
      $region18: #{conv2d_cascade.1} parent=11 // pred_check_branch
        %234 = sbr.rel (%p232) target = $region20
      $region19: #{conv2d_cascade.1} parent=11 // pred_region
        _
      $region20: #{conv2d_cascade.1} parent=11 // pred_fallthru
        _
      // Predicated region
      $region21: #{conv2d_cascade.1} parent=11 // pred_check
        %p235 = pneg %p104
      $region22: #{conv2d_cascade.1} parent=11 // pred_check_branch
        %237 = sbr.rel (%p235) target = $region24
      $region23: #{conv2d_cascade.1} parent=11 // pred_region
        _
      $region24: #{conv2d_cascade.1} parent=11 // pred_fallthru
        _
      // Predicated region
      $region25: #{conv2d_cascade.1} parent=11 // pred_check
        %p238 = pneg %p125
      $region26: #{conv2d_cascade.1} parent=11 // pred_check_branch
        %240 = sbr.rel (%p238) target = $region28
      $region27: #{conv2d_cascade.1} parent=11 // pred_region
        _
      $region28: #{conv2d_cascade.1} parent=11 // pred_fallthru
        _
      // Predicated region
      $region29: #{conv2d_cascade.1} parent=11 // pred_check
        %p241 = pneg %p146
      $region30: #{conv2d_cascade.1} parent=11 // pred_check_branch
        %243 = sbr.rel (%p241) target = $region32
      $region31: #{conv2d_cascade.1} parent=11 // pred_region
        _
      $region32: #{conv2d_cascade.1} parent=11 // pred_fallthru
        _
      // Predicated region
      $region33: #{conv2d_cascade.1} parent=11 // pred_check
        %p244 = pneg %p167
      $region34: #{conv2d_cascade.1} parent=11 // pred_check_branch
        %246 = sbr.rel (%p244) target = $region36
      $region35: #{conv2d_cascade.1} parent=11 // pred_region
        _
      $region36: #{conv2d_cascade.1} parent=11 // pred_fallthru
        _
      // Predicated region
      $region37: #{conv2d_cascade.1} parent=11 // pred_check
        %p247 = pneg %p188
      $region38: #{conv2d_cascade.1} parent=11 // pred_check_branch
        %249 = sbr.rel (%p247) target = $region40
      $region39: #{conv2d_cascade.1} parent=11 // pred_region
        _
      $region40: #{conv2d_cascade.1} parent=11 // pred_fallthru
        _
    $region12: #{conv2d_cascade.1} parent=5 // pred_fallthru
      _
    %p250 = scmp.lt.s32.totalorder %s15, 2
    // Predicated region
    $region41: #{conv2d_cascade.1} parent=5 // pred_check
      %p251 = pneg %p250
    $region42: #{conv2d_cascade.1} parent=5 // pred_check_branch
      %253 = sbr.rel (%p251) target = $region44
    $region43: #{conv2d_cascade.1} parent=5 // pred_region
      // Predicated region
      $region45: #{conv2d_cascade.1} parent=43 // pred_check
        %p254 = pneg %p35
      $region46: #{conv2d_cascade.1} parent=43 // pred_check_branch
        %256 = sbr.rel (%p254) target = $region48
      $region47: #{conv2d_cascade.1} parent=43 // pred_region
        %p257 = scmp.lt.s32.totalorder %s15, 1
        %s258 = scalar_select %p257, %s15, 1
        %s259 = smul.addr %s258, 2
        %s260 = smul.addr %s259, 8
        %s261 = scalar_lea.vmem %s0, %s260
      $region48: #{conv2d_cascade.1} parent=43 // pred_fallthru
        _
    $region44: #{conv2d_cascade.1} parent=5 // pred_fallthru
      _
    %p262 = scmp.le.s32.totalorder 1, %s15
    %p263 = scmp.lt.s32.totalorder %s15, 3
    %p264 = pnand %p262, %p263
    %p265 = pneg %p264
    // Predicated region
    $region49: #{conv2d_cascade.1} parent=5 // pred_check
      _
    $region50: #{conv2d_cascade.1} parent=5 // pred_check_branch
      %267 = sbr.rel (%p264) target = $region52
    $region51: #{conv2d_cascade.1} parent=5 // pred_region
      %s268 = ssub.s32 %s15, 1
      %p269 = scmp.lt.s32.totalorder %s20, 1
      %s270 = scalar_select %p269, %s20, 1
      %s271 = smul.addr %s270, 2
      %s272 = smul.addr %s271, 8
      %s273 = scalar_lea.vmem %s0, %s272
      %p274 = pneg %p41
      %p275 = pneg %p38
      %p276 = pneg %p62
      %p277 = pneg %p59
      %p278 = pneg %p83
      %p279 = pneg %p80
      %p280 = pneg %p104
      %p281 = pneg %p101
      %p282 = pneg %p125
      %p283 = pneg %p122
      %p284 = pneg %p146
      %p285 = pneg %p143
      %p286 = pneg %p167
      %p287 = pneg %p164
      %p288 = pneg %p188
      %p289 = pneg %p185
      %p290 = pneg %p214
      %p291 = pneg %p211
      %p292 = scmp.lt.s32.totalorder %s20, 1
      %s293 = scalar_select %p292, %s20, 1
      %s294 = smul.addr %s293, 2
      %s295 = smul.addr %s294, 8
      %s296 = scalar_lea.vmem %s8, %s295
      %p297 = scmp.lt.s32.totalorder %s20, 1
      %s298 = scalar_select %p297, %s20, 1
      %s299 = smul.addr %s298, 2
      %s300 = smul.addr %s299, 8
      %s301 = scalar_lea.vmem %s0, %s300
      %p302 = scmp.lt.s32.totalorder %s20, 1
      %s303 = scalar_select %p302, %s20, 1
      %s304 = smul.addr %s303, 2
      %s305 = smul.addr %s304, 8
      %s306 = scalar_lea.vmem %s8, %s305
      %s307 = sld [smem:[#allocation5]]
      %vm308 = vcmask 516096
      %309 = vst.msk [vmem:[#allocation2] sm:$0x1] %vm308, 0.0
      %310 = vst.msk [vmem:[#allocation2 + $0x11] sm:$0x1] %vm308, 0.0
      %311 = vst [vmem:[#allocation3] sm:$0x1] 0.0
      %312 = vst [vmem:[#allocation3 + $0x11] sm:$0x1] 0.0
      %313 = vst [vmem:[#allocation4] sm:$0x1] 0.0
      %314 = vst [vmem:[#allocation4 + $0x11] sm:$0x1] 0.0
      %v315 = vld [vmem:[%s301] sm:$0xff]
      %v316 = vld [vmem:[%s301 + $0x8] sm:$0xff]
      %vm317 = vcmask 523264
      %318 = vst.msk [vmem:[#allocation2 + $0x1] sm:$0xff] %vm317, %v315
      %319 = vst.msk [vmem:[#allocation2 + $0x9] sm:$0xff] %vm317, %v316
      %v320 = vld [vmem:[#allocation2] sm:$0xff]
      %v321 = vld [vmem:[#allocation2 + $0x8] sm:$0xff]
      %v322 = vld [vmem:[%s1] sm:$0xff]
      %v323 = vld [vmem:[%s1 + $0x8] sm:$0xff]
      %v324 = vld [vmem:[%s1 + $0x10] sm:$0xff]
      %v325 = vld [vmem:[%s1 + $0x18] sm:$0xff]
      %v326 = vld [vmem:[%s1 + $0x20] sm:$0xff]
      %v327 = vld [vmem:[%s1 + $0x28] sm:$0xff]
      %v328 = vld [vmem:[%s1 + $0x30] sm:$0xff]
      %v329 = vld [vmem:[%s1 + $0x38] sm:$0xff]
      %v330 = vld [vmem:[#allocation2 + $0x1] sm:$0xff]
      %v331 = vld [vmem:[#allocation2 + $0x9] sm:$0xff]
      %s332 = scalar_lea.vmem %s1, 64
      %v333 = vld [vmem:[%s332] sm:$0xff]
      %v334 = vld [vmem:[%s332 + $0x8] sm:$0xff]
      %v335 = vld [vmem:[%s332 + $0x10] sm:$0xff]
      %v336 = vld [vmem:[%s332 + $0x18] sm:$0xff]
      %v337 = vld [vmem:[%s332 + $0x20] sm:$0xff]
      %v338 = vld [vmem:[%s332 + $0x28] sm:$0xff]
      %v339 = vld [vmem:[%s332 + $0x30] sm:$0xff]
      %v340 = vld [vmem:[%s332 + $0x38] sm:$0xff]
      %v342 = vsel %vm317, %v330, 0
      %v345 = vsel %vm317, %v331, 0
      %347 = vmatprep.subr.mxu0 0.0
      %348 = vmatpush1.msra.mxu0 %v333
      %349 = vmatprep.subr.mxu0 0.0
      %350 = vmatpush1.msra.mxu0 %v334
      %351 = vmatprep.subr.mxu0 0.0
      %352 = vmatpush1.msra.mxu0 %v335
      %353 = vmatprep.subr.mxu0 0.0
      %354 = vmatpush1.msra.mxu0 %v336
      %355 = vmatprep.subr.mxu0 0.0
      %356 = vmatpush1.msra.mxu0 %v337
      %357 = vmatprep.subr.mxu0 0.0
      %358 = vmatpush1.msra.mxu0 %v338
      %359 = vmatprep.subr.mxu0 0.0
      %360 = vmatpush1.msra.mxu0 %v339
      %361 = vmatprep.subr.mxu0 0.0
      %362 = vmatpush1.msra.mxu0 %v340
      %363 = vmatprep.subr.mxu0 0.0
      %364 = vmatpush1.msra.mxu0 0.0
      %365 = vmatprep.subr.mxu0 0.0
      %366 = vmatpush1.msra.mxu0 0.0
      %367 = vmatprep.subr.mxu0 0.0
      %368 = vmatpush1.msra.mxu0 0.0
      %369 = vmatprep.subr.mxu0 0.0
      %370 = vmatpush1.msra.mxu0 0.0
      %371 = vmatprep.subr.mxu0 0.0
      %372 = vmatpush1.msra.mxu0 0.0
      %373 = vmatprep.subr.mxu0 0.0
      %374 = vmatpush1.msra.mxu0 0.0
      %375 = vmatprep.subr.mxu0 0.0
      %376 = vmatpush1.msra.mxu0 0.0
      %377 = vmatprep.subr.mxu0 0.0
      %378 = vmatpush1.msra.mxu0 0.0
      %379 = vmatprep.subr.mxu0 0.0
      %380 = vmatpush1.msra.mxu0 0.0
      %381 = vmatprep.subr.mxu0 0.0
      %382 = vmatpush1.msra.mxu0 0.0
      %383 = vmatprep.subr.mxu0 0.0
      %384 = vmatpush1.msra.mxu0 0.0
      %385 = vmatprep.subr.mxu0 0.0
      %386 = vmatpush1.msra.mxu0 0.0
      %387 = vmatprep.subr.mxu0 0.0
      %388 = vmatpush1.msra.mxu0 0.0
      %389 = vmatprep.subr.mxu0 0.0
      %390 = vmatpush1.msra.mxu0 0.0
      %391 = vmatprep.subr.mxu0 0.0
      %392 = vmatpush1.msra.mxu0 0.0
      %393 = vmatprep.subr.mxu0 0.0
      %394 = vmatpush1.msra.mxu0 0.0
      %395 = vmatprep.subr.mxu0 0.0
      %396 = vmatpush1.msra.mxu0 0.0
      %397 = vmatprep.subr.mxu0 0.0
      %398 = vmatpush1.msra.mxu0 0.0
      %399 = vmatprep.subr.mxu0 0.0
      %400 = vmatpush1.msra.mxu0 0.0
      %401 = vmatprep.subr.mxu0 0.0
      %402 = vmatpush1.msra.mxu0 0.0
      %403 = vmatprep.subr.mxu0 0.0
      %404 = vmatpush1.msra.mxu0 0.0
      %405 = vmatprep.subr.mxu0 0.0
      %406 = vmatpush1.msra.mxu0 0.0
      %407 = vmatprep.subr.mxu0 0.0
      %408 = vmatpush1.msra.mxu0 0.0
      %409 = vmatprep.subr.mxu0 0.0
      %410 = vmatpush1.msra.mxu0 0.0
      %411 = vmatprep.mubr.f32.mxu0 0.0
      %412 = vmatmul.mubr.f32.gmra.mrb[0].mxu0 %v342
      %v413 = vpop.f32.mrb[0].mxu0
      %v414 = vadd.f32 0.0, %v413
      %v415 = vpop.f32.mrb[0].mxu0
      %416 = vmatprep.mubr.f32.mxu0 0.0
      %417 = vmatmul.mubr.f32.gmra.mrb[0].mxu0 %v345
      %v418 = vpop.f32.mrb[0].mxu0
      %v419 = vadd.f32 0.0, %v418
      %v420 = vpop.f32.mrb[0].mxu0
      %421 = vdwg.mxu0
      %v423 = vsel %vm317, %v320, 0
      %v426 = vsel %vm317, %v321, 0
      %428 = vmatprep.subr.mxu0 0.0
      %429 = vmatpush1.msra.mxu0 %v322
      %430 = vmatprep.subr.mxu0 0.0
      %431 = vmatpush1.msra.mxu0 %v323
      %432 = vmatprep.subr.mxu0 0.0
      %433 = vmatpush1.msra.mxu0 %v324
      %434 = vmatprep.subr.mxu0 0.0
      %435 = vmatpush1.msra.mxu0 %v325
      %436 = vmatprep.subr.mxu0 0.0
      %437 = vmatpush1.msra.mxu0 %v326
      %438 = vmatprep.subr.mxu0 0.0
      %439 = vmatpush1.msra.mxu0 %v327
      %440 = vmatprep.subr.mxu0 0.0
      %441 = vmatpush1.msra.mxu0 %v328
      %442 = vmatprep.subr.mxu0 0.0
      %443 = vmatpush1.msra.mxu0 %v329
      %444 = vmatprep.subr.mxu0 0.0
      %445 = vmatpush1.msra.mxu0 0.0
      %446 = vmatprep.subr.mxu0 0.0
      %447 = vmatpush1.msra.mxu0 0.0
      %448 = vmatprep.subr.mxu0 0.0
      %449 = vmatpush1.msra.mxu0 0.0
      %450 = vmatprep.subr.mxu0 0.0
      %451 = vmatpush1.msra.mxu0 0.0
      %452 = vmatprep.subr.mxu0 0.0
      %453 = vmatpush1.msra.mxu0 0.0
      %454 = vmatprep.subr.mxu0 0.0
      %455 = vmatpush1.msra.mxu0 0.0
      %456 = vmatprep.subr.mxu0 0.0
      %457 = vmatpush1.msra.mxu0 0.0
      %458 = vmatprep.subr.mxu0 0.0
      %459 = vmatpush1.msra.mxu0 0.0
      %460 = vmatprep.subr.mxu0 0.0
      %461 = vmatpush1.msra.mxu0 0.0
      %462 = vmatprep.subr.mxu0 0.0
      %463 = vmatpush1.msra.mxu0 0.0
      %464 = vmatprep.subr.mxu0 0.0
      %465 = vmatpush1.msra.mxu0 0.0
      %466 = vmatprep.subr.mxu0 0.0
      %467 = vmatpush1.msra.mxu0 0.0
      %468 = vmatprep.subr.mxu0 0.0
      %469 = vmatpush1.msra.mxu0 0.0
      %470 = vmatprep.subr.mxu0 0.0
      %471 = vmatpush1.msra.mxu0 0.0
      %472 = vmatprep.subr.mxu0 0.0
      %473 = vmatpush1.msra.mxu0 0.0
      %474 = vmatprep.subr.mxu0 0.0
      %475 = vmatpush1.msra.mxu0 0.0
      %476 = vmatprep.subr.mxu0 0.0
      %477 = vmatpush1.msra.mxu0 0.0
      %478 = vmatprep.subr.mxu0 0.0
      %479 = vmatpush1.msra.mxu0 0.0
      %480 = vmatprep.subr.mxu0 0.0
      %481 = vmatpush1.msra.mxu0 0.0
      %482 = vmatprep.subr.mxu0 0.0
      %483 = vmatpush1.msra.mxu0 0.0
      %484 = vmatprep.subr.mxu0 0.0
      %485 = vmatpush1.msra.mxu0 0.0
      %486 = vmatprep.subr.mxu0 0.0
      %487 = vmatpush1.msra.mxu0 0.0
      %488 = vmatprep.subr.mxu0 0.0
      %489 = vmatpush1.msra.mxu0 0.0
      %490 = vmatprep.subr.mxu0 0.0
      %491 = vmatpush1.msra.mxu0 0.0
      %492 = vmatprep.mubr.f32.mxu0 0.0
      %493 = vmatmul.mubr.f32.gmra.mrb[0].mxu0 %v423
      %v494 = vpop.f32.mrb[0].mxu0
      %v495 = vadd.f32 %v414, %v494
      %v496 = vpop.f32.mrb[0].mxu0
      %497 = vmatprep.mubr.f32.mxu0 0.0
      %498 = vmatmul.mubr.f32.gmra.mrb[0].mxu0 %v426
      %v499 = vpop.f32.mrb[0].mxu0
      %v500 = vadd.f32 %v419, %v499
      %v501 = vpop.f32.mrb[0].mxu0
      %502 = vdwg.mxu0
      %v503 = vld [vmem:[#allocation2 + $0x2] sm:$0xff]
      %v504 = vld [vmem:[#allocation2 + $0xa] sm:$0xff]
      %s505 = scalar_lea.vmem %s1, 128
      %v506 = vld [vmem:[%s505] sm:$0xff]
      %v507 = vld [vmem:[%s505 + $0x8] sm:$0xff]
      %v508 = vld [vmem:[%s505 + $0x10] sm:$0xff]
      %v509 = vld [vmem:[%s505 + $0x18] sm:$0xff]
      %v510 = vld [vmem:[%s505 + $0x20] sm:$0xff]
      %v511 = vld [vmem:[%s505 + $0x28] sm:$0xff]
      %v512 = vld [vmem:[%s505 + $0x30] sm:$0xff]
      %v513 = vld [vmem:[%s505 + $0x38] sm:$0xff]
      %v515 = vsel %vm317, %v503, 0
      %v518 = vsel %vm317, %v504, 0
      %520 = vmatprep.subr.mxu0 0.0
      %521 = vmatpush1.msra.mxu0 %v506
      %522 = vmatprep.subr.mxu0 0.0
      %523 = vmatpush1.msra.mxu0 %v507
      %524 = vmatprep.subr.mxu0 0.0
      %525 = vmatpush1.msra.mxu0 %v508
      %526 = vmatprep.subr.mxu0 0.0
      %527 = vmatpush1.msra.mxu0 %v509
      %528 = vmatprep.subr.mxu0 0.0
      %529 = vmatpush1.msra.mxu0 %v510
      %530 = vmatprep.subr.mxu0 0.0
      %531 = vmatpush1.msra.mxu0 %v511
      %532 = vmatprep.subr.mxu0 0.0
      %533 = vmatpush1.msra.mxu0 %v512
      %534 = vmatprep.subr.mxu0 0.0
      %535 = vmatpush1.msra.mxu0 %v513
      %536 = vmatprep.subr.mxu0 0.0
      %537 = vmatpush1.msra.mxu0 0.0
      %538 = vmatprep.subr.mxu0 0.0
      %539 = vmatpush1.msra.mxu0 0.0
      %540 = vmatprep.subr.mxu0 0.0
      %541 = vmatpush1.msra.mxu0 0.0
      %542 = vmatprep.subr.mxu0 0.0
      %543 = vmatpush1.msra.mxu0 0.0
      %544 = vmatprep.subr.mxu0 0.0
      %545 = vmatpush1.msra.mxu0 0.0
      %546 = vmatprep.subr.mxu0 0.0
      %547 = vmatpush1.msra.mxu0 0.0
      %548 = vmatprep.subr.mxu0 0.0
      %549 = vmatpush1.msra.mxu0 0.0
      %550 = vmatprep.subr.mxu0 0.0
      %551 = vmatpush1.msra.mxu0 0.0
      %552 = vmatprep.subr.mxu0 0.0
      %553 = vmatpush1.msra.mxu0 0.0
      %554 = vmatprep.subr.mxu0 0.0
      %555 = vmatpush1.msra.mxu0 0.0
      %556 = vmatprep.subr.mxu0 0.0
      %557 = vmatpush1.msra.mxu0 0.0
      %558 = vmatprep.subr.mxu0 0.0
      %559 = vmatpush1.msra.mxu0 0.0
      %560 = vmatprep.subr.mxu0 0.0
      %561 = vmatpush1.msra.mxu0 0.0
      %562 = vmatprep.subr.mxu0 0.0
      %563 = vmatpush1.msra.mxu0 0.0
      %564 = vmatprep.subr.mxu0 0.0
      %565 = vmatpush1.msra.mxu0 0.0
      %566 = vmatprep.subr.mxu0 0.0
      %567 = vmatpush1.msra.mxu0 0.0
      %568 = vmatprep.subr.mxu0 0.0
      %569 = vmatpush1.msra.mxu0 0.0
      %570 = vmatprep.subr.mxu0 0.0
      %571 = vmatpush1.msra.mxu0 0.0
      %572 = vmatprep.subr.mxu0 0.0
      %573 = vmatpush1.msra.mxu0 0.0
      %574 = vmatprep.subr.mxu0 0.0
      %575 = vmatpush1.msra.mxu0 0.0
      %576 = vmatprep.subr.mxu0 0.0
      %577 = vmatpush1.msra.mxu0 0.0
      %578 = vmatprep.subr.mxu0 0.0
      %579 = vmatpush1.msra.mxu0 0.0
      %580 = vmatprep.subr.mxu0 0.0
      %581 = vmatpush1.msra.mxu0 0.0
      %582 = vmatprep.subr.mxu0 0.0
      %583 = vmatpush1.msra.mxu0 0.0
      %584 = vmatprep.mubr.f32.mxu0 0.0
      %585 = vmatmul.mubr.f32.gmra.mrb[0].mxu0 %v515
      %v586 = vpop.f32.mrb[0].mxu0
      %v587 = vadd.f32 0.0, %v586
      %v588 = vpop.f32.mrb[0].mxu0
      %589 = vmatprep.mubr.f32.mxu0 0.0
      %590 = vmatmul.mubr.f32.gmra.mrb[0].mxu0 %v518
      %v591 = vpop.f32.mrb[0].mxu0
      %v592 = vadd.f32 0.0, %v591
      %v593 = vpop.f32.mrb[0].mxu0
      %594 = vdwg.mxu0
      %v595 = vadd.f32 %v495, %v587
      %v596 = vadd.f32 %v500, %v592
      %v597 = vld [vmem:[%s2] sm:$0x1]
      %v599 = vlaneseq
      %v600 = vshrl.u32 %v599, 7
      %v601 = vsub.s32 0, %v600
      %v602 = vrot.slane %v597, %v601
      %v604 = vadd.f32 %v595, %v602
      %v605 = vadd.f32 %v596, %v602
      %vm606 = vcmp.ge.f32.partialorder %v604, 0.0
      %vm607 = vcmp.ge.f32.partialorder %v605, 0.0
      %v608 = vstv %s307
      %v609 = vmul.f32 %v608, %v604
      %v610 = vmul.f32 %v608, %v605
      %v611 = vsel %vm606, %v604, %v609
      %v612 = vsel %vm607, %v605, %v610
      %613 = vst [vmem:[#allocation3 + $0x1] sm:$0xff] %v611
      %614 = vst [vmem:[#allocation3 + $0x9] sm:$0xff] %v612
      %v615 = vld [vmem:[#allocation3] sm:$0xff]
      %v616 = vld [vmem:[#allocation3 + $0x8] sm:$0xff]
      %v617 = vld [vmem:[%s3] sm:$0xff]
      %v618 = vld [vmem:[%s3 + $0x8] sm:$0xff]
      %v619 = vld [vmem:[%s3 + $0x10] sm:$0xff]
      %v620 = vld [vmem:[%s3 + $0x18] sm:$0xff]
      %v621 = vld [vmem:[%s3 + $0x20] sm:$0xff]
      %v622 = vld [vmem:[%s3 + $0x28] sm:$0xff]
      %v623 = vld [vmem:[%s3 + $0x30] sm:$0xff]
      %v624 = vld [vmem:[%s3 + $0x38] sm:$0xff]
      %v625 = vld [vmem:[%s3 + $0x40] sm:$0xff]
      %v626 = vld [vmem:[%s3 + $0x48] sm:$0xff]
      %v627 = vld [vmem:[%s3 + $0x50] sm:$0xff]
      %v628 = vld [vmem:[%s3 + $0x58] sm:$0xff]
      %v629 = vld [vmem:[%s3 + $0x60] sm:$0xff]
      %v630 = vld [vmem:[%s3 + $0x68] sm:$0xff]
      %v631 = vld [vmem:[%s3 + $0x70] sm:$0xff]
      %v632 = vld [vmem:[%s3 + $0x78] sm:$0xff]
      %v633 = vld [vmem:[#allocation3 + $0x1] sm:$0xff]
      %v634 = vld [vmem:[#allocation3 + $0x9] sm:$0xff]
      %s635 = scalar_lea.vmem %s3, 128
      %v636 = vld [vmem:[%s635] sm:$0xff]
      %v637 = vld [vmem:[%s635 + $0x8] sm:$0xff]
      %v638 = vld [vmem:[%s635 + $0x10] sm:$0xff]
      %v639 = vld [vmem:[%s635 + $0x18] sm:$0xff]
      %v640 = vld [vmem:[%s635 + $0x20] sm:$0xff]
      %v641 = vld [vmem:[%s635 + $0x28] sm:$0xff]
      %v642 = vld [vmem:[%s635 + $0x30] sm:$0xff]
      %v643 = vld [vmem:[%s635 + $0x38] sm:$0xff]
      %v644 = vld [vmem:[%s635 + $0x40] sm:$0xff]
      %v645 = vld [vmem:[%s635 + $0x48] sm:$0xff]
      %v646 = vld [vmem:[%s635 + $0x50] sm:$0xff]
      %v647 = vld [vmem:[%s635 + $0x58] sm:$0xff]
      %v648 = vld [vmem:[%s635 + $0x60] sm:$0xff]
      %v649 = vld [vmem:[%s635 + $0x68] sm:$0xff]
      %v650 = vld [vmem:[%s635 + $0x70] sm:$0xff]
      %v651 = vld [vmem:[%s635 + $0x78] sm:$0xff]
      %652 = vmatprep.subr.mxu0 0.0
      %653 = vmatpush1.msra.mxu0 %v636
      %654 = vmatprep.subr.mxu0 0.0
      %655 = vmatpush1.msra.mxu0 %v637
      %656 = vmatprep.subr.mxu0 0.0
      %657 = vmatpush1.msra.mxu0 %v638
      %658 = vmatprep.subr.mxu0 0.0
      %659 = vmatpush1.msra.mxu0 %v639
      %660 = vmatprep.subr.mxu0 0.0
      %661 = vmatpush1.msra.mxu0 %v640
      %662 = vmatprep.subr.mxu0 0.0
      %663 = vmatpush1.msra.mxu0 %v641
      %664 = vmatprep.subr.mxu0 0.0
      %665 = vmatpush1.msra.mxu0 %v642
      %666 = vmatprep.subr.mxu0 0.0
      %667 = vmatpush1.msra.mxu0 %v643
      %668 = vmatprep.subr.mxu0 0.0
      %669 = vmatpush1.msra.mxu0 %v644
      %670 = vmatprep.subr.mxu0 0.0
      %671 = vmatpush1.msra.mxu0 %v645
      %672 = vmatprep.subr.mxu0 0.0
      %673 = vmatpush1.msra.mxu0 %v646
      %674 = vmatprep.subr.mxu0 0.0
      %675 = vmatpush1.msra.mxu0 %v647
      %676 = vmatprep.subr.mxu0 0.0
      %677 = vmatpush1.msra.mxu0 %v648
      %678 = vmatprep.subr.mxu0 0.0
      %679 = vmatpush1.msra.mxu0 %v649
      %680 = vmatprep.subr.mxu0 0.0
      %681 = vmatpush1.msra.mxu0 %v650
      %682 = vmatprep.subr.mxu0 0.0
      %683 = vmatpush1.msra.mxu0 %v651
      %684 = vmatprep.subr.mxu0 0.0
      %685 = vmatpush1.msra.mxu0 0.0
      %686 = vmatprep.subr.mxu0 0.0
      %687 = vmatpush1.msra.mxu0 0.0
      %688 = vmatprep.subr.mxu0 0.0
      %689 = vmatpush1.msra.mxu0 0.0
      %690 = vmatprep.subr.mxu0 0.0
      %691 = vmatpush1.msra.mxu0 0.0
      %692 = vmatprep.subr.mxu0 0.0
      %693 = vmatpush1.msra.mxu0 0.0
      %694 = vmatprep.subr.mxu0 0.0
      %695 = vmatpush1.msra.mxu0 0.0
      %696 = vmatprep.subr.mxu0 0.0
      %697 = vmatpush1.msra.mxu0 0.0
      %698 = vmatprep.subr.mxu0 0.0
      %699 = vmatpush1.msra.mxu0 0.0
      %700 = vmatprep.subr.mxu0 0.0
      %701 = vmatpush1.msra.mxu0 0.0
      %702 = vmatprep.subr.mxu0 0.0
      %703 = vmatpush1.msra.mxu0 0.0
      %704 = vmatprep.subr.mxu0 0.0
      %705 = vmatpush1.msra.mxu0 0.0
      %706 = vmatprep.subr.mxu0 0.0
      %707 = vmatpush1.msra.mxu0 0.0
      %708 = vmatprep.subr.mxu0 0.0
      %709 = vmatpush1.msra.mxu0 0.0
      %710 = vmatprep.subr.mxu0 0.0
      %711 = vmatpush1.msra.mxu0 0.0
      %712 = vmatprep.subr.mxu0 0.0
      %713 = vmatpush1.msra.mxu0 0.0
      %714 = vmatprep.subr.mxu0 0.0
      %715 = vmatpush1.msra.mxu0 0.0
      %716 = vmatprep.mubr.f32.mxu0 0.0
      %717 = vmatmul.mubr.f32.gmra.mrb[0].mxu0 %v633
      %v718 = vpop.f32.mrb[0].mxu0
      %v719 = vadd.f32 0.0, %v718
      %v720 = vpop.f32.mrb[0].mxu0
      %721 = vmatprep.mubr.f32.mxu0 0.0
      %722 = vmatmul.mubr.f32.gmra.mrb[0].mxu0 %v634
      %v723 = vpop.f32.mrb[0].mxu0
      %v724 = vadd.f32 0.0, %v723
      %v725 = vpop.f32.mrb[0].mxu0
      %726 = vdwg.mxu0
      %727 = vmatprep.subr.mxu0 0.0
      %728 = vmatpush1.msra.mxu0 %v617
      %729 = vmatprep.subr.mxu0 0.0
      %730 = vmatpush1.msra.mxu0 %v618
      %731 = vmatprep.subr.mxu0 0.0
      %732 = vmatpush1.msra.mxu0 %v619
      %733 = vmatprep.subr.mxu0 0.0
      %734 = vmatpush1.msra.mxu0 %v620
      %735 = vmatprep.subr.mxu0 0.0
      %736 = vmatpush1.msra.mxu0 %v621
      %737 = vmatprep.subr.mxu0 0.0
      %738 = vmatpush1.msra.mxu0 %v622
      %739 = vmatprep.subr.mxu0 0.0
      %740 = vmatpush1.msra.mxu0 %v623
      %741 = vmatprep.subr.mxu0 0.0
      %742 = vmatpush1.msra.mxu0 %v624
      %743 = vmatprep.subr.mxu0 0.0
      %744 = vmatpush1.msra.mxu0 %v625
      %745 = vmatprep.subr.mxu0 0.0
      %746 = vmatpush1.msra.mxu0 %v626
      %747 = vmatprep.subr.mxu0 0.0
      %748 = vmatpush1.msra.mxu0 %v627
      %749 = vmatprep.subr.mxu0 0.0
      %750 = vmatpush1.msra.mxu0 %v628
      %751 = vmatprep.subr.mxu0 0.0
      %752 = vmatpush1.msra.mxu0 %v629
      %753 = vmatprep.subr.mxu0 0.0
      %754 = vmatpush1.msra.mxu0 %v630
      %755 = vmatprep.subr.mxu0 0.0
      %756 = vmatpush1.msra.mxu0 %v631
      %757 = vmatprep.subr.mxu0 0.0
      %758 = vmatpush1.msra.mxu0 %v632
      %759 = vmatprep.subr.mxu0 0.0
      %760 = vmatpush1.msra.mxu0 0.0
      %761 = vmatprep.subr.mxu0 0.0
      %762 = vmatpush1.msra.mxu0 0.0
      %763 = vmatprep.subr.mxu0 0.0
      %764 = vmatpush1.msra.mxu0 0.0
      %765 = vmatprep.subr.mxu0 0.0
      %766 = vmatpush1.msra.mxu0 0.0
      %767 = vmatprep.subr.mxu0 0.0
      %768 = vmatpush1.msra.mxu0 0.0
      %769 = vmatprep.subr.mxu0 0.0
      %770 = vmatpush1.msra.mxu0 0.0
      %771 = vmatprep.subr.mxu0 0.0
      %772 = vmatpush1.msra.mxu0 0.0
      %773 = vmatprep.subr.mxu0 0.0
      %774 = vmatpush1.msra.mxu0 0.0
      %775 = vmatprep.subr.mxu0 0.0
      %776 = vmatpush1.msra.mxu0 0.0
      %777 = vmatprep.subr.mxu0 0.0
      %778 = vmatpush1.msra.mxu0 0.0
      %779 = vmatprep.subr.mxu0 0.0
      %780 = vmatpush1.msra.mxu0 0.0
      %781 = vmatprep.subr.mxu0 0.0
      %782 = vmatpush1.msra.mxu0 0.0
      %783 = vmatprep.subr.mxu0 0.0
      %784 = vmatpush1.msra.mxu0 0.0
      %785 = vmatprep.subr.mxu0 0.0
      %786 = vmatpush1.msra.mxu0 0.0
      %787 = vmatprep.subr.mxu0 0.0
      %788 = vmatpush1.msra.mxu0 0.0
      %789 = vmatprep.subr.mxu0 0.0
      %790 = vmatpush1.msra.mxu0 0.0
      %791 = vmatprep.mubr.f32.mxu0 0.0
      %792 = vmatmul.mubr.f32.gmra.mrb[0].mxu0 %v615
      %v793 = vpop.f32.mrb[0].mxu0
      %v794 = vadd.f32 %v719, %v793
      %v795 = vpop.f32.mrb[0].mxu0
      %796 = vmatprep.mubr.f32.mxu0 0.0
      %797 = vmatmul.mubr.f32.gmra.mrb[0].mxu0 %v616
      %v798 = vpop.f32.mrb[0].mxu0
      %v799 = vadd.f32 %v724, %v798
      %v800 = vpop.f32.mrb[0].mxu0
      %801 = vdwg.mxu0
      %v802 = vld [vmem:[#allocation3 + $0x2] sm:$0xff]
      %v803 = vld [vmem:[#allocation3 + $0xa] sm:$0xff]
      %s804 = scalar_lea.vmem %s3, 256
      %v805 = vld [vmem:[%s804] sm:$0xff]
      %v806 = vld [vmem:[%s804 + $0x8] sm:$0xff]
      %v807 = vld [vmem:[%s804 + $0x10] sm:$0xff]
      %v808 = vld [vmem:[%s804 + $0x18] sm:$0xff]
      %v809 = vld [vmem:[%s804 + $0x20] sm:$0xff]
      %v810 = vld [vmem:[%s804 + $0x28] sm:$0xff]
      %v811 = vld [vmem:[%s804 + $0x30] sm:$0xff]
      %v812 = vld [vmem:[%s804 + $0x38] sm:$0xff]
      %v813 = vld [vmem:[%s804 + $0x40] sm:$0xff]
      %v814 = vld [vmem:[%s804 + $0x48] sm:$0xff]
      %v815 = vld [vmem:[%s804 + $0x50] sm:$0xff]
      %v816 = vld [vmem:[%s804 + $0x58] sm:$0xff]
      %v817 = vld [vmem:[%s804 + $0x60] sm:$0xff]
      %v818 = vld [vmem:[%s804 + $0x68] sm:$0xff]
      %v819 = vld [vmem:[%s804 + $0x70] sm:$0xff]
      %v820 = vld [vmem:[%s804 + $0x78] sm:$0xff]
      %821 = vmatprep.subr.mxu0 0.0
      %822 = vmatpush1.msra.mxu0 %v805
      %823 = vmatprep.subr.mxu0 0.0
      %824 = vmatpush1.msra.mxu0 %v806
      %825 = vmatprep.subr.mxu0 0.0
      %826 = vmatpush1.msra.mxu0 %v807
      %827 = vmatprep.subr.mxu0 0.0
      %828 = vmatpush1.msra.mxu0 %v808
      %829 = vmatprep.subr.mxu0 0.0
      %830 = vmatpush1.msra.mxu0 %v809
      %831 = vmatprep.subr.mxu0 0.0
      %832 = vmatpush1.msra.mxu0 %v810
      %833 = vmatprep.subr.mxu0 0.0
      %834 = vmatpush1.msra.mxu0 %v811
      %835 = vmatprep.subr.mxu0 0.0
      %836 = vmatpush1.msra.mxu0 %v812
      %837 = vmatprep.subr.mxu0 0.0
      %838 = vmatpush1.msra.mxu0 %v813
      %839 = vmatprep.subr.mxu0 0.0
      %840 = vmatpush1.msra.mxu0 %v814
      %841 = vmatprep.subr.mxu0 0.0
      %842 = vmatpush1.msra.mxu0 %v815
      %843 = vmatprep.subr.mxu0 0.0
      %844 = vmatpush1.msra.mxu0 %v816
      %845 = vmatprep.subr.mxu0 0.0
      %846 = vmatpush1.msra.mxu0 %v817
      %847 = vmatprep.subr.mxu0 0.0
      %848 = vmatpush1.msra.mxu0 %v818
      %849 = vmatprep.subr.mxu0 0.0
      %850 = vmatpush1.msra.mxu0 %v819
      %851 = vmatprep.subr.mxu0 0.0
      %852 = vmatpush1.msra.mxu0 %v820
      %853 = vmatprep.subr.mxu0 0.0
      %854 = vmatpush1.msra.mxu0 0.0
      %855 = vmatprep.subr.mxu0 0.0
      %856 = vmatpush1.msra.mxu0 0.0
      %857 = vmatprep.subr.mxu0 0.0
      %858 = vmatpush1.msra.mxu0 0.0
      %859 = vmatprep.subr.mxu0 0.0
      %860 = vmatpush1.msra.mxu0 0.0
      %861 = vmatprep.subr.mxu0 0.0
      %862 = vmatpush1.msra.mxu0 0.0
      %863 = vmatprep.subr.mxu0 0.0
      %864 = vmatpush1.msra.mxu0 0.0
      %865 = vmatprep.subr.mxu0 0.0
      %866 = vmatpush1.msra.mxu0 0.0
      %867 = vmatprep.subr.mxu0 0.0
      %868 = vmatpush1.msra.mxu0 0.0
      %869 = vmatprep.subr.mxu0 0.0
      %870 = vmatpush1.msra.mxu0 0.0
      %871 = vmatprep.subr.mxu0 0.0
      %872 = vmatpush1.msra.mxu0 0.0
      %873 = vmatprep.subr.mxu0 0.0
      %874 = vmatpush1.msra.mxu0 0.0
      %875 = vmatprep.subr.mxu0 0.0
      %876 = vmatpush1.msra.mxu0 0.0
      %877 = vmatprep.subr.mxu0 0.0
      %878 = vmatpush1.msra.mxu0 0.0
      %879 = vmatprep.subr.mxu0 0.0
      %880 = vmatpush1.msra.mxu0 0.0
      %881 = vmatprep.subr.mxu0 0.0
      %882 = vmatpush1.msra.mxu0 0.0
      %883 = vmatprep.subr.mxu0 0.0
      %884 = vmatpush1.msra.mxu0 0.0
      %885 = vmatprep.mubr.f32.mxu0 0.0
      %886 = vmatmul.mubr.f32.gmra.mrb[0].mxu0 %v802
      %v887 = vpop.f32.mrb[0].mxu0
      %v888 = vadd.f32 0.0, %v887
      %v889 = vpop.f32.mrb[0].mxu0
      %890 = vmatprep.mubr.f32.mxu0 0.0
      %891 = vmatmul.mubr.f32.gmra.mrb[0].mxu0 %v803
      %v892 = vpop.f32.mrb[0].mxu0
      %v893 = vadd.f32 0.0, %v892
      %v894 = vpop.f32.mrb[0].mxu0
      %895 = vdwg.mxu0
      %v896 = vadd.f32 %v794, %v888
      %v897 = vadd.f32 %v799, %v893
      %v898 = vld [vmem:[%s4] sm:$0x1]
      %v900 = vlaneseq
      %v901 = vshrl.u32 %v900, 7
      %v902 = vsub.s32 0, %v901
      %v903 = vrot.slane %v898, %v902
      %v905 = vadd.f32 %v896, %v903
      %v906 = vadd.f32 %v897, %v903
      %vm907 = vcmp.ge.f32.partialorder %v905, 0.0
      %vm908 = vcmp.ge.f32.partialorder %v906, 0.0
      %v909 = vmul.f32 %v608, %v905
      %v910 = vmul.f32 %v608, %v906
      %v911 = vsel %vm907, %v905, %v909
      %v912 = vsel %vm908, %v906, %v910
      %913 = vst [vmem:[#allocation4 + $0x1] sm:$0xff] %v911
      %914 = vst [vmem:[#allocation4 + $0x9] sm:$0xff] %v912
      %v915 = vld [vmem:[#allocation4] sm:$0xff]
      %v916 = vld [vmem:[#allocation4 + $0x8] sm:$0xff]
      %v917 = vld [vmem:[%s5] sm:$0xff]
      %v918 = vld [vmem:[%s5 + $0x8] sm:$0xff]
      %v919 = vld [vmem:[%s5 + $0x10] sm:$0xff]
      %v920 = vld [vmem:[%s5 + $0x18] sm:$0xff]
      %v921 = vld [vmem:[%s5 + $0x20] sm:$0xff]
      %v922 = vld [vmem:[%s5 + $0x28] sm:$0xff]
      %v923 = vld [vmem:[%s5 + $0x30] sm:$0xff]
      %v924 = vld [vmem:[%s5 + $0x38] sm:$0xff]
      %v925 = vld [vmem:[%s5 + $0x40] sm:$0xff]
      %v926 = vld [vmem:[%s5 + $0x48] sm:$0xff]
      %v927 = vld [vmem:[%s5 + $0x50] sm:$0xff]
      %v928 = vld [vmem:[%s5 + $0x58] sm:$0xff]
      %v929 = vld [vmem:[%s5 + $0x60] sm:$0xff]
      %v930 = vld [vmem:[%s5 + $0x68] sm:$0xff]
      %v931 = vld [vmem:[%s5 + $0x70] sm:$0xff]
      %v932 = vld [vmem:[%s5 + $0x78] sm:$0xff]
      %v933 = vld [vmem:[#allocation4 + $0x1] sm:$0xff]
      %v934 = vld [vmem:[#allocation4 + $0x9] sm:$0xff]
      %s935 = scalar_lea.vmem %s5, 128
      %v936 = vld [vmem:[%s935] sm:$0xff]
      %v937 = vld [vmem:[%s935 + $0x8] sm:$0xff]
      %v938 = vld [vmem:[%s935 + $0x10] sm:$0xff]
      %v939 = vld [vmem:[%s935 + $0x18] sm:$0xff]
      %v940 = vld [vmem:[%s935 + $0x20] sm:$0xff]
      %v941 = vld [vmem:[%s935 + $0x28] sm:$0xff]
      %v942 = vld [vmem:[%s935 + $0x30] sm:$0xff]
      %v943 = vld [vmem:[%s935 + $0x38] sm:$0xff]
      %v944 = vld [vmem:[%s935 + $0x40] sm:$0xff]
      %v945 = vld [vmem:[%s935 + $0x48] sm:$0xff]
      %v946 = vld [vmem:[%s935 + $0x50] sm:$0xff]
      %v947 = vld [vmem:[%s935 + $0x58] sm:$0xff]
      %v948 = vld [vmem:[%s935 + $0x60] sm:$0xff]
      %v949 = vld [vmem:[%s935 + $0x68] sm:$0xff]
      %v950 = vld [vmem:[%s935 + $0x70] sm:$0xff]
      %v951 = vld [vmem:[%s935 + $0x78] sm:$0xff]
      %952 = vmatprep.subr.mxu0 0.0
      %953 = vmatpush1.msra.mxu0 %v936
      %954 = vmatprep.subr.mxu0 0.0
      %955 = vmatpush1.msra.mxu0 %v937
      %956 = vmatprep.subr.mxu0 0.0
      %957 = vmatpush1.msra.mxu0 %v938
      %958 = vmatprep.subr.mxu0 0.0
      %959 = vmatpush1.msra.mxu0 %v939
      %960 = vmatprep.subr.mxu0 0.0
      %961 = vmatpush1.msra.mxu0 %v940
      %962 = vmatprep.subr.mxu0 0.0
      %963 = vmatpush1.msra.mxu0 %v941
      %964 = vmatprep.subr.mxu0 0.0
      %965 = vmatpush1.msra.mxu0 %v942
      %966 = vmatprep.subr.mxu0 0.0
      %967 = vmatpush1.msra.mxu0 %v943
      %968 = vmatprep.subr.mxu0 0.0
      %969 = vmatpush1.msra.mxu0 %v944
      %970 = vmatprep.subr.mxu0 0.0
      %971 = vmatpush1.msra.mxu0 %v945
      %972 = vmatprep.subr.mxu0 0.0
      %973 = vmatpush1.msra.mxu0 %v946
      %974 = vmatprep.subr.mxu0 0.0
      %975 = vmatpush1.msra.mxu0 %v947
      %976 = vmatprep.subr.mxu0 0.0
      %977 = vmatpush1.msra.mxu0 %v948
      %978 = vmatprep.subr.mxu0 0.0
      %979 = vmatpush1.msra.mxu0 %v949
      %980 = vmatprep.subr.mxu0 0.0
      %981 = vmatpush1.msra.mxu0 %v950
      %982 = vmatprep.subr.mxu0 0.0
      %983 = vmatpush1.msra.mxu0 %v951
      %984 = vmatprep.subr.mxu0 0.0
      %985 = vmatpush1.msra.mxu0 0.0
      %986 = vmatprep.subr.mxu0 0.0
      %987 = vmatpush1.msra.mxu0 0.0
      %988 = vmatprep.subr.mxu0 0.0
      %989 = vmatpush1.msra.mxu0 0.0
      %990 = vmatprep.subr.mxu0 0.0
      %991 = vmatpush1.msra.mxu0 0.0
      %992 = vmatprep.subr.mxu0 0.0
      %993 = vmatpush1.msra.mxu0 0.0
      %994 = vmatprep.subr.mxu0 0.0
      %995 = vmatpush1.msra.mxu0 0.0
      %996 = vmatprep.subr.mxu0 0.0
      %997 = vmatpush1.msra.mxu0 0.0
      %998 = vmatprep.subr.mxu0 0.0
      %999 = vmatpush1.msra.mxu0 0.0
      %1000 = vmatprep.subr.mxu0 0.0
      %1001 = vmatpush1.msra.mxu0 0.0
      %1002 = vmatprep.subr.mxu0 0.0
      %1003 = vmatpush1.msra.mxu0 0.0
      %1004 = vmatprep.subr.mxu0 0.0
      %1005 = vmatpush1.msra.mxu0 0.0
      %1006 = vmatprep.subr.mxu0 0.0
      %1007 = vmatpush1.msra.mxu0 0.0
      %1008 = vmatprep.subr.mxu0 0.0
      %1009 = vmatpush1.msra.mxu0 0.0
      %1010 = vmatprep.subr.mxu0 0.0
      %1011 = vmatpush1.msra.mxu0 0.0
      %1012 = vmatprep.subr.mxu0 0.0
      %1013 = vmatpush1.msra.mxu0 0.0
      %1014 = vmatprep.subr.mxu0 0.0
      %1015 = vmatpush1.msra.mxu0 0.0
      %1016 = vmatprep.mubr.f32.mxu0 0.0
      %1017 = vmatmul.mubr.f32.gmra.mrb[0].mxu0 %v933
      %v1018 = vpop.f32.mrb[0].mxu0
      %v1019 = vadd.f32 0.0, %v1018
      %v1020 = vpop.f32.mrb[0].mxu0
      %1021 = vmatprep.mubr.f32.mxu0 0.0
      %1022 = vmatmul.mubr.f32.gmra.mrb[0].mxu0 %v934
      %v1023 = vpop.f32.mrb[0].mxu0
      %v1024 = vadd.f32 0.0, %v1023
      %v1025 = vpop.f32.mrb[0].mxu0
      %1026 = vdwg.mxu0
      %1027 = vmatprep.subr.mxu0 0.0
      %1028 = vmatpush1.msra.mxu0 %v917
      %1029 = vmatprep.subr.mxu0 0.0
      %1030 = vmatpush1.msra.mxu0 %v918
      %1031 = vmatprep.subr.mxu0 0.0
      %1032 = vmatpush1.msra.mxu0 %v919
      %1033 = vmatprep.subr.mxu0 0.0
      %1034 = vmatpush1.msra.mxu0 %v920
      %1035 = vmatprep.subr.mxu0 0.0
      %1036 = vmatpush1.msra.mxu0 %v921
      %1037 = vmatprep.subr.mxu0 0.0
      %1038 = vmatpush1.msra.mxu0 %v922
      %1039 = vmatprep.subr.mxu0 0.0
      %1040 = vmatpush1.msra.mxu0 %v923
      %1041 = vmatprep.subr.mxu0 0.0
      %1042 = vmatpush1.msra.mxu0 %v924
      %1043 = vmatprep.subr.mxu0 0.0
      %1044 = vmatpush1.msra.mxu0 %v925
      %1045 = vmatprep.subr.mxu0 0.0
      %1046 = vmatpush1.msra.mxu0 %v926
      %1047 = vmatprep.subr.mxu0 0.0
      %1048 = vmatpush1.msra.mxu0 %v927
      %1049 = vmatprep.subr.mxu0 0.0
      %1050 = vmatpush1.msra.mxu0 %v928
      %1051 = vmatprep.subr.mxu0 0.0
      %1052 = vmatpush1.msra.mxu0 %v929
      %1053 = vmatprep.subr.mxu0 0.0
      %1054 = vmatpush1.msra.mxu0 %v930
      %1055 = vmatprep.subr.mxu0 0.0
      %1056 = vmatpush1.msra.mxu0 %v931
      %1057 = vmatprep.subr.mxu0 0.0
      %1058 = vmatpush1.msra.mxu0 %v932
      %1059 = vmatprep.subr.mxu0 0.0
      %1060 = vmatpush1.msra.mxu0 0.0
      %1061 = vmatprep.subr.mxu0 0.0
      %1062 = vmatpush1.msra.mxu0 0.0
      %1063 = vmatprep.subr.mxu0 0.0
      %1064 = vmatpush1.msra.mxu0 0.0
      %1065 = vmatprep.subr.mxu0 0.0
      %1066 = vmatpush1.msra.mxu0 0.0
      %1067 = vmatprep.subr.mxu0 0.0
      %1068 = vmatpush1.msra.mxu0 0.0
      %1069 = vmatprep.subr.mxu0 0.0
      %1070 = vmatpush1.msra.mxu0 0.0
      %1071 = vmatprep.subr.mxu0 0.0
      %1072 = vmatpush1.msra.mxu0 0.0
      %1073 = vmatprep.subr.mxu0 0.0
      %1074 = vmatpush1.msra.mxu0 0.0
      %1075 = vmatprep.subr.mxu0 0.0
      %1076 = vmatpush1.msra.mxu0 0.0
      %1077 = vmatprep.subr.mxu0 0.0
      %1078 = vmatpush1.msra.mxu0 0.0
      %1079 = vmatprep.subr.mxu0 0.0
      %1080 = vmatpush1.msra.mxu0 0.0
      %1081 = vmatprep.subr.mxu0 0.0
      %1082 = vmatpush1.msra.mxu0 0.0
      %1083 = vmatprep.subr.mxu0 0.0
      %1084 = vmatpush1.msra.mxu0 0.0
      %1085 = vmatprep.subr.mxu0 0.0
      %1086 = vmatpush1.msra.mxu0 0.0
      %1087 = vmatprep.subr.mxu0 0.0
      %1088 = vmatpush1.msra.mxu0 0.0
      %1089 = vmatprep.subr.mxu0 0.0
      %1090 = vmatpush1.msra.mxu0 0.0
      %1091 = vmatprep.mubr.f32.mxu0 0.0
      %1092 = vmatmul.mubr.f32.gmra.mrb[0].mxu0 %v915
      %v1093 = vpop.f32.mrb[0].mxu0
      %v1094 = vadd.f32 %v1019, %v1093
      %v1095 = vpop.f32.mrb[0].mxu0
      %1096 = vmatprep.mubr.f32.mxu0 0.0
      %1097 = vmatmul.mubr.f32.gmra.mrb[0].mxu0 %v916
      %v1098 = vpop.f32.mrb[0].mxu0
      %v1099 = vadd.f32 %v1024, %v1098
      %v1100 = vpop.f32.mrb[0].mxu0
      %1101 = vdwg.mxu0
      %v1102 = vld [vmem:[#allocation4 + $0x2] sm:$0xff]
      %v1103 = vld [vmem:[#allocation4 + $0xa] sm:$0xff]
      %s1104 = scalar_lea.vmem %s5, 256
      %v1105 = vld [vmem:[%s1104] sm:$0xff]
      %v1106 = vld [vmem:[%s1104 + $0x8] sm:$0xff]
      %v1107 = vld [vmem:[%s1104 + $0x10] sm:$0xff]
      %v1108 = vld [vmem:[%s1104 + $0x18] sm:$0xff]
      %v1109 = vld [vmem:[%s1104 + $0x20] sm:$0xff]
      %v1110 = vld [vmem:[%s1104 + $0x28] sm:$0xff]
      %v1111 = vld [vmem:[%s1104 + $0x30] sm:$0xff]
      %v1112 = vld [vmem:[%s1104 + $0x38] sm:$0xff]
      %v1113 = vld [vmem:[%s1104 + $0x40] sm:$0xff]
      %v1114 = vld [vmem:[%s1104 + $0x48] sm:$0xff]
      %v1115 = vld [vmem:[%s1104 + $0x50] sm:$0xff]
      %v1116 = vld [vmem:[%s1104 + $0x58] sm:$0xff]
      %v1117 = vld [vmem:[%s1104 + $0x60] sm:$0xff]
      %v1118 = vld [vmem:[%s1104 + $0x68] sm:$0xff]
      %v1119 = vld [vmem:[%s1104 + $0x70] sm:$0xff]
      %v1120 = vld [vmem:[%s1104 + $0x78] sm:$0xff]
      %1121 = vmatprep.subr.mxu0 0.0
      %1122 = vmatpush1.msra.mxu0 %v1105
      %1123 = vmatprep.subr.mxu0 0.0
      %1124 = vmatpush1.msra.mxu0 %v1106
      %1125 = vmatprep.subr.mxu0 0.0
      %1126 = vmatpush1.msra.mxu0 %v1107
      %1127 = vmatprep.subr.mxu0 0.0
      %1128 = vmatpush1.msra.mxu0 %v1108
      %1129 = vmatprep.subr.mxu0 0.0
      %1130 = vmatpush1.msra.mxu0 %v1109
      %1131 = vmatprep.subr.mxu0 0.0
      %1132 = vmatpush1.msra.mxu0 %v1110
      %1133 = vmatprep.subr.mxu0 0.0
      %1134 = vmatpush1.msra.mxu0 %v1111
      %1135 = vmatprep.subr.mxu0 0.0
      %1136 = vmatpush1.msra.mxu0 %v1112
      %1137 = vmatprep.subr.mxu0 0.0
      %1138 = vmatpush1.msra.mxu0 %v1113
      %1139 = vmatprep.subr.mxu0 0.0
      %1140 = vmatpush1.msra.mxu0 %v1114
      %1141 = vmatprep.subr.mxu0 0.0
      %1142 = vmatpush1.msra.mxu0 %v1115
      %1143 = vmatprep.subr.mxu0 0.0
      %1144 = vmatpush1.msra.mxu0 %v1116
      %1145 = vmatprep.subr.mxu0 0.0
      %1146 = vmatpush1.msra.mxu0 %v1117
      %1147 = vmatprep.subr.mxu0 0.0
      %1148 = vmatpush1.msra.mxu0 %v1118
      %1149 = vmatprep.subr.mxu0 0.0
      %1150 = vmatpush1.msra.mxu0 %v1119
      %1151 = vmatprep.subr.mxu0 0.0
      %1152 = vmatpush1.msra.mxu0 %v1120
      %1153 = vmatprep.subr.mxu0 0.0
      %1154 = vmatpush1.msra.mxu0 0.0
      %1155 = vmatprep.subr.mxu0 0.0
      %1156 = vmatpush1.msra.mxu0 0.0
      %1157 = vmatprep.subr.mxu0 0.0
      %1158 = vmatpush1.msra.mxu0 0.0
      %1159 = vmatprep.subr.mxu0 0.0
      %1160 = vmatpush1.msra.mxu0 0.0
      %1161 = vmatprep.subr.mxu0 0.0
      %1162 = vmatpush1.msra.mxu0 0.0
      %1163 = vmatprep.subr.mxu0 0.0
      %1164 = vmatpush1.msra.mxu0 0.0
      %1165 = vmatprep.subr.mxu0 0.0
      %1166 = vmatpush1.msra.mxu0 0.0
      %1167 = vmatprep.subr.mxu0 0.0
      %1168 = vmatpush1.msra.mxu0 0.0
      %1169 = vmatprep.subr.mxu0 0.0
      %1170 = vmatpush1.msra.mxu0 0.0
      %1171 = vmatprep.subr.mxu0 0.0
      %1172 = vmatpush1.msra.mxu0 0.0
      %1173 = vmatprep.subr.mxu0 0.0
      %1174 = vmatpush1.msra.mxu0 0.0
      %1175 = vmatprep.subr.mxu0 0.0
      %1176 = vmatpush1.msra.mxu0 0.0
      %1177 = vmatprep.subr.mxu0 0.0
      %1178 = vmatpush1.msra.mxu0 0.0
      %1179 = vmatprep.subr.mxu0 0.0
      %1180 = vmatpush1.msra.mxu0 0.0
      %1181 = vmatprep.subr.mxu0 0.0
      %1182 = vmatpush1.msra.mxu0 0.0
      %1183 = vmatprep.subr.mxu0 0.0
      %1184 = vmatpush1.msra.mxu0 0.0
      %1185 = vmatprep.mubr.f32.mxu0 0.0
      %1186 = vmatmul.mubr.f32.gmra.mrb[0].mxu0 %v1102
      %v1187 = vpop.f32.mrb[0].mxu0
      %v1188 = vadd.f32 0.0, %v1187
      %v1189 = vpop.f32.mrb[0].mxu0
      %1190 = vmatprep.mubr.f32.mxu0 0.0
      %1191 = vmatmul.mubr.f32.gmra.mrb[0].mxu0 %v1103
      %v1192 = vpop.f32.mrb[0].mxu0
      %v1193 = vadd.f32 0.0, %v1192
      %v1194 = vpop.f32.mrb[0].mxu0
      %1195 = vdwg.mxu0
      %v1196 = vadd.f32 %v1094, %v1188
      %v1197 = vadd.f32 %v1099, %v1193
      %v1198 = vld [vmem:[%s6] sm:$0x1]
      %v1200 = vlaneseq
      %v1201 = vshrl.u32 %v1200, 7
      %v1202 = vsub.s32 0, %v1201
      %v1203 = vrot.slane %v1198, %v1202
      %v1205 = vadd.f32 %v1196, %v1203
      %v1206 = vadd.f32 %v1197, %v1203
      %1207 = vst [vmem:[%s306] sm:$0xff] %v1205
      %1208 = vst [vmem:[%s306 + $0x8] sm:$0xff] %v1206
      %p1209 = scmp.lt.s32.totalorder %s20, 1
      %s1210 = scalar_select %p1209, %s20, 1
      %s1211 = smul.addr %s1210, 2
      %s1212 = smul.addr %s1211, 8
      %s1213 = scalar_lea.vmem %s8, %s1212
      // Predicated region
      $region53: #{conv2d_cascade.1} parent=51 // pred_check
        %p1214 = pneg %p211
      $region54: #{conv2d_cascade.1} parent=51 // pred_check_branch
        %1216 = sbr.rel (%p1214) target = $region56
      $region55: #{conv2d_cascade.1} parent=51 // pred_region
        _
      $region56: #{conv2d_cascade.1} parent=51 // pred_fallthru
        _
    $region52: #{conv2d_cascade.1} parent=5 // pred_fallthru
      _
    %p1217 = scmp.le.s32.totalorder 2, %s15
    // Predicated region
    $region57: #{conv2d_cascade.1} parent=5 // pred_check
      %p1218 = pneg %p1217
    $region58: #{conv2d_cascade.1} parent=5 // pred_check_branch
      %1220 = sbr.rel (%p1218) target = $region60
    $region59: #{conv2d_cascade.1} parent=5 // pred_region
      %s1221 = ssub.s32 %s15, 2
      // Predicated region
      $region61: #{conv2d_cascade.1} parent=59 // pred_check
        %p1222 = pneg %p217
      $region62: #{conv2d_cascade.1} parent=59 // pred_check_branch
        %1224 = sbr.rel (%p1222) target = $region64
      $region63: #{conv2d_cascade.1} parent=59 // pred_region
        %p1225 = scmp.lt.s32.totalorder %s21, 1
        %s1226 = scalar_select %p1225, %s21, 1
        %s1227 = smul.addr %s1226, 2
        %s1228 = smul.addr %s1227, 8
        %s1229 = scalar_lea.vmem %s8, %s1228
      $region64: #{conv2d_cascade.1} parent=59 // pred_fallthru
        _
    $region60: #{conv2d_cascade.1} parent=5 // pred_fallthru
      _
  $region6: #{conv2d_cascade.1} parent=0 // loop_footer
    %s19 = sadd.s32 1, %s15
  $region7: #{conv2d_cascade.1} parent=0 // loop_footer_branch
    %14 = sbr.rel target = $region3
  $region8: #{conv2d_cascade.1} parent=0 // loop_exit
    _

</llo_original>
